<compile_context>
chip_gen: v7x
topology: tpu7x:2x2x1
jax: 0.10.0
libtpu: 0.0.40
codegen_flags: <defaults>
</compile_context>

<pallas_src>
import functools

import jax
import jax.numpy as jnp
from jax.experimental import pallas as pl
from jax.experimental.pallas import tpu as pltpu


def _round_up(a, b):
    return (a + b - 1) // b * b


def _conv_tile(xm_ref, xh_ref, w_ref, *, W, kH, kW, Lt):
    """Conv for one spatial tile of Lt flattened output columns.

    xm_ref : (Cin, Lt)        main input chunk (flat q = h*W + w, padded x)
    xh_ref : (Cin, Hl)        halo = next Hl columns of the padded flat input
    w_ref  : (kH*kW, Cout, Cin)  tap-major weights
    Returns (Cout, Lt) f32.  Columns whose (q % W) >= Wo or q >= L read across
    the row boundary and are masked/cropped by the caller.
    """
    xin = jnp.concatenate([xm_ref[...], xh_ref[...]], axis=1)   # (Cin, Lt+Hl)
    acc = None
    for kh in range(kH):
        for kw in range(kW):
            s = kh * W + kw                       # constant flat shift
            xs = xin[:, s:s + Lt]                 # (Cin, Lt) lane-shifted slice
            wt = w_ref[kh * kW + kw]              # (Cout, Cin), static index
            p = jnp.dot(wt, xs, preferred_element_type=jnp.float32)
            acc = p if acc is None else acc + p
    return acc


def _conv_stats_kernel(xm_ref, xh_ref, w_ref, mask_ref,
                       y_ref, psum_ref, psq_ref, *, W, kH, kW, Lt):
    y = _conv_tile(xm_ref, xh_ref, w_ref, W=W, kH=kH, kW=kW, Lt=Lt)
    y_ref[...] = y.astype(y_ref.dtype)            # lane-dense store of conv out

    ym = y * mask_ref[...]                        # zero invalid columns
    C = psum_ref.shape[0]
    ps = jnp.zeros((C, 128), jnp.float32)
    pq = jnp.zeros((C, 128), jnp.float32)
    # Lane-block accumulation: VPU adds only (no cross-lane XLU reduce here).
    for j in range(Lt // 128):
        blk = ym[:, j * 128:(j + 1) * 128]
        ps = ps + blk
        pq = pq + blk * blk
    psum_ref[...] = ps
    psq_ref[...] = pq


def _bn_relu_kernel(y_ref, scale_ref, shift_ref, o_ref):
    # Pure elementwise: one FMA + ReLU per element, lane-dense load/store.
    y = y_ref[...].astype(jnp.float32)
    o_ref[...] = jnp.maximum(y * scale_ref[...] + shift_ref[...], 0.0
                             ).astype(o_ref.dtype)


def down_unet2d_bridge_block(x_nchw, w_oihw, b, gamma, beta,
                             kx=3, ky=3, eps=1e-5, target_tile_cols=32768):
    """x_nchw: (N, C, H, W) like PyTorch. Returns (N, C, Ho, W - ky + 1)."""
    del b  # Train-mode BatchNorm cancels a per-channel conv bias exactly.
    N, C, H, W = x_nchw.shape
    kH, kW = kx, ky
    ph = kx // 2
    Hp = H + 2 * ph
    Ho = Hp - kH + 1
    Wo = W - kW + 1
    L = Ho * W                                    # full-width rows (tail masked)

    max_start = (kH - 1) * W + (kW - 1)           # largest tap shift
    Hl = _round_up(max(max_start, 1), 128)        # halo block, 128-aligned
    # Spatial tile (multiple of Hl so the halo BlockSpec index is an integer
    # block index), capped so VMEM stays small on v7x (64 MiB physical).
    Lt = min(_round_up(L, Hl), max(Hl, _round_up(target_tile_cols, Hl)))
    n_tiles = -(-L // Lt)
    L_total = n_tiles * Lt
    P_total = L_total + Hl                        # >= Hp*W (covers all taps)

    dtype = x_nchw.dtype

    # ---- single fused wrapper-side pad: H halo + flat tail in one jnp.pad ----
    x_flat = x_nchw.reshape(N, C, H * W)
    x_flat = jnp.pad(x_flat, ((0, 0), (0, 0),
                              (ph * W, P_total - H * W - ph * W)))

    # OIHW -> (kH*kW, Cout, Cin), tap-major (kh, kw)
    w3 = jnp.transpose(w_oihw, (2, 3, 0, 1)).reshape(kH * kW, C, C)
    w3 = w3.astype(jnp.float32)

    # Validity mask over flattened output columns (hoisted once).
    idx = jnp.arange(L_total, dtype=jnp.int32)
    mask = ((idx < L) & ((idx % W) < Wo)).astype(jnp.float32).reshape(1, L_total)

    r = Lt // Hl
    xm_spec = pl.BlockSpec((None, C, Lt), lambda n, t: (n, 0, t))
    xh_spec = pl.BlockSpec((None, C, Hl), lambda n, t: (n, 0, (t + 1) * r))
    w_spec = pl.BlockSpec((kH * kW, C, C), lambda n, t: (0, 0, 0))
    m_spec = pl.BlockSpec((1, Lt), lambda n, t: (0, t))
    y_spec = pl.BlockSpec((None, C, Lt), lambda n, t: (n, 0, t))
    p_spec = pl.BlockSpec((None, None, C, 128), lambda n, t: (n, t, 0, 0))
    vec_spec = pl.BlockSpec((C, 1), lambda n, t: (0, 0))

    conv_flops = 2 * N * L_total * kH * kW * C * C
    vmem_limit = 48 * 1024 * 1024                 # safe on v5e/v6e/v7x

    # ---- pass 1: conv tile -> y (f32) + per-tile (C,128) partial stats ----
    stats_kernel = functools.partial(_conv_stats_kernel,
                                     W=W, kH=kH, kW=kW, Lt=Lt)
    y_flat, psum, psq = pl.pallas_call(
        stats_kernel,
        out_shape=(jax.ShapeDtypeStruct((N, C, L_total), jnp.float32),
                   jax.ShapeDtypeStruct((N, n_tiles, C, 128), jnp.float32),
                   jax.ShapeDtypeStruct((N, n_tiles, C, 128), jnp.float32)),
        grid_spec=pltpu.PrefetchScalarGridSpec(
            num_scalar_prefetch=0,
            grid=(N, n_tiles),
            in_specs=[xm_spec, xh_spec, w_spec, m_spec],
            out_specs=[y_spec, p_spec, p_spec]),
        compiler_params=pltpu.CompilerParams(
            dimension_semantics=("parallel", "parallel"),
            vmem_limit_bytes=vmem_limit),
        cost_estimate=pl.CostEstimate(
            flops=int(conv_flops), transcendentals=0,
            bytes_accessed=int(4 * N * C * (P_total + Hl * n_tiles + L_total)
                               + 4 * N * L_total)),
    )(x_flat, x_flat, w3, mask)

    # ---- per-channel finalize (tiny, plain JAX): scale / shift ----
    cnt = jnp.float32(N * Ho * Wo)
    csum = jnp.sum(psum, axis=(0, 1, 3))                  # (C,)
    csq = jnp.sum(psq, axis=(0, 1, 3))                    # (C,)
    mean = csum / cnt
    var = jnp.maximum(csq / cnt - mean * mean, 0.0)       # clamp E[y^2]-mean^2
    inv = jax.lax.rsqrt(var + eps)
    g32 = gamma.astype(jnp.float32)
    scale = (g32 * inv).reshape(C, 1)
    shift = (beta.astype(jnp.float32) - mean * g32 * inv).reshape(C, 1)

    # ---- pass 2: elementwise FMA + ReLU on the stored conv output ----
    out_flat = pl.pallas_call(
        _bn_relu_kernel,
        out_shape=jax.ShapeDtypeStruct((N, C, L_total), dtype),
        grid_spec=pltpu.PrefetchScalarGridSpec(
            num_scalar_prefetch=0,
            grid=(N, n_tiles),
            in_specs=[y_spec, vec_spec, vec_spec],
            out_specs=y_spec),
        compiler_params=pltpu.CompilerParams(
            dimension_semantics=("parallel", "parallel"),
            vmem_limit_bytes=vmem_limit),
        cost_estimate=pl.CostEstimate(
            flops=int(2 * N * C * L_total), transcendentals=0,
            bytes_accessed=int(8 * N * C * L_total)),
    )(y_flat, scale, shift)

    # strip masked tail columns / rows -> (N, C, Ho, Wo)
    out = out_flat[:, :, :L].reshape(N, C, Ho, W)[:, :, :, :Wo]
    return out


def _reference(x_nchw, w_oihw, b, gamma, beta, kx=3, ky=3, eps=1e-5):
    ph = kx // 2
    y = jax.lax.conv_general_dilated(
        x_nchw, w_oihw, window_strides=(1, 1),
        padding=((ph, ph), (0, 0)),
        dimension_numbers=("NCHW", "OIHW", "NCHW"))
    y = y + b.reshape(1, -1, 1, 1)
    mean = y.mean(axis=(0, 2, 3), keepdims=True)
    var = ((y - mean) ** 2).mean(axis=(0, 2, 3), keepdims=True)
    y = (y - mean) * jax.lax.rsqrt(var + eps) * gamma.reshape(1, -1, 1, 1) \
        + beta.reshape(1, -1, 1, 1)
    return jnp.maximum(y, 0.0)


if __name__ == "__main__":
    filters, kx, ky = 8, 3, 3
    N, H, W = 2, 16, 16

    key = jax.random.PRNGKey(0)
    kx_key, kw_key, kb_key, kg_key, kbeta_key = jax.random.split(key, 5)

    x = jax.random.normal(kx_key, (N, filters, H, W), dtype=jnp.float32)
    w = 0.1 * jax.random.normal(kw_key, (filters, filters, kx, ky), jnp.float32)
    b = 0.1 * jax.random.normal(kb_key, (filters,), jnp.float32)
    gamma = 1.0 + 0.05 * jax.random.normal(kg_key, (filters,), jnp.float32)
    beta = 0.05 * jax.random.normal(kbeta_key, (filters,), jnp.float32)

    out = down_unet2d_bridge_block(x, w, b, gamma, beta, kx=kx, ky=ky)
    out = jax.block_until_ready(out)

    ref = _reference(x, w, b, gamma, beta, kx=kx, ky=ky)
    assert out.shape == (N, filters, H, W - ky + 1), out.shape
    err = float(jnp.max(jnp.abs(out - ref)))
    assert err < 5e-4, err

    # TODO(synk): BatchNorm2d running_mean / running_var buffer updates are a
    # training-time side effect and are not modeled (they do not affect y).
    print("KERNEL_OK")
</pallas_src>

<mosaic_0001>
module attributes {stable_mosaic.version = 11 : i64} {
  func.func @_conv_stats_kernel(%arg0: i32, %arg1: i32, %arg2: memref<1x8x256xf32, #tpu.memory_space<vmem>>, %arg3: memref<1x8x128xf32, #tpu.memory_space<vmem>>, %arg4: memref<9x8x8xf32, #tpu.memory_space<vmem>>, %arg5: memref<1x256xf32, #tpu.memory_space<vmem>>, %arg6: memref<1x8x256xf32, #tpu.memory_space<vmem>>, %arg7: memref<1x1x8x128xf32, #tpu.memory_space<vmem>>, %arg8: memref<1x1x8x128xf32, #tpu.memory_space<vmem>>) attributes {dimension_semantics = [#tpu.dimension_semantics<parallel>, #tpu.dimension_semantics<parallel>], iteration_bounds = array<i64: 2, 1>, scalar_prefetch = 0 : i64, scratch_operands = 0 : i64, tpu.core_type = #tpu.core_type<tc>, window_params = [{transform_indices = @transform_0, window_bounds = array<i64: 1, 8, 256>}, {transform_indices = @transform_1, window_bounds = array<i64: 1, 8, 128>}, {pipeline_mode = #tpu.pipeline_mode<synchronous>, transform_indices = @transform_2, window_bounds = array<i64: 9, 8, 8>}, {transform_indices = @transform_3, window_bounds = array<i64: 1, 256>}, {transform_indices = @transform_4, window_bounds = array<i64: 1, 8, 256>}, {transform_indices = @transform_5, window_bounds = array<i64: 1, 1, 8, 128>}, {transform_indices = @transform_6, window_bounds = array<i64: 1, 1, 8, 128>}]} {
    %c0 = arith.constant 0 : index
    %c0_0 = arith.constant 0 : index
    %c0_1 = arith.constant 0 : index
    %0 = vector.load %arg2[%c0, %c0_0, %c0_1] : memref<1x8x256xf32, #tpu.memory_space<vmem>>, vector<1x8x256xf32>
    %1 = vector.shape_cast %0 : vector<1x8x256xf32> to vector<8x256xf32>
    %c0_2 = arith.constant 0 : index
    %c0_3 = arith.constant 0 : index
    %c0_4 = arith.constant 0 : index
    %2 = vector.load %arg3[%c0_2, %c0_3, %c0_4] : memref<1x8x128xf32, #tpu.memory_space<vmem>>, vector<1x8x128xf32>
    %3 = vector.shape_cast %2 : vector<1x8x128xf32> to vector<8x128xf32>
    %4 = tpu.concatenate %1, %3 in 1 : vector<8x256xf32>, vector<8x128xf32> -> vector<8x384xf32>
    %5 = vector.extract_strided_slice %4 {offsets = [0, 0], sizes = [8, 256], strides = [1, 1]} : vector<8x384xf32> to vector<8x256xf32>
    %c0_5 = arith.constant 0 : index
    %c0_6 = arith.constant 0 : index
    %c0_7 = arith.constant 0 : index
    %6 = vector.load %arg4[%c0_5, %c0_6, %c0_7] : memref<9x8x8xf32, #tpu.memory_space<vmem>>, vector<1x8x8xf32>
    %7 = vector.shape_cast %6 : vector<1x8x8xf32> to vector<8x8xf32>
    %cst = arith.constant dense<0.000000e+00> : vector<8x256xf32>
    %8 = tpu.matmul %7, %5, %cst {dimension_numbers = #tpu.dot_dimension_numbers<[1], [0], [0], [1], [0, 0, 1, 1], [], []>} : vector<8x8xf32>, vector<8x256xf32>, vector<8x256xf32> -> vector<8x256xf32>
    %9 = vector.extract_strided_slice %4 {offsets = [0, 1], sizes = [8, 256], strides = [1, 1]} : vector<8x384xf32> to vector<8x256xf32>
    %c1 = arith.constant 1 : index
    %c0_8 = arith.constant 0 : index
    %c0_9 = arith.constant 0 : index
    %10 = vector.load %arg4[%c1, %c0_8, %c0_9] : memref<9x8x8xf32, #tpu.memory_space<vmem>>, vector<1x8x8xf32>
    %11 = vector.shape_cast %10 : vector<1x8x8xf32> to vector<8x8xf32>
    %cst_10 = arith.constant dense<0.000000e+00> : vector<8x256xf32>
    %12 = tpu.matmul %11, %9, %cst_10 {dimension_numbers = #tpu.dot_dimension_numbers<[1], [0], [0], [1], [0, 0, 1, 1], [], []>} : vector<8x8xf32>, vector<8x256xf32>, vector<8x256xf32> -> vector<8x256xf32>
    %13 = arith.addf %8, %12 : vector<8x256xf32>
    %14 = vector.extract_strided_slice %4 {offsets = [0, 2], sizes = [8, 256], strides = [1, 1]} : vector<8x384xf32> to vector<8x256xf32>
    %c2 = arith.constant 2 : index
    %c0_11 = arith.constant 0 : index
    %c0_12 = arith.constant 0 : index
    %15 = vector.load %arg4[%c2, %c0_11, %c0_12] : memref<9x8x8xf32, #tpu.memory_space<vmem>>, vector<1x8x8xf32>
    %16 = vector.shape_cast %15 : vector<1x8x8xf32> to vector<8x8xf32>
    %cst_13 = arith.constant dense<0.000000e+00> : vector<8x256xf32>
    %17 = tpu.matmul %16, %14, %cst_13 {dimension_numbers = #tpu.dot_dimension_numbers<[1], [0], [0], [1], [0, 0, 1, 1], [], []>} : vector<8x8xf32>, vector<8x256xf32>, vector<8x256xf32> -> vector<8x256xf32>
    %18 = arith.addf %13, %17 : vector<8x256xf32>
    %19 = vector.extract_strided_slice %4 {offsets = [0, 16], sizes = [8, 256], strides = [1, 1]} : vector<8x384xf32> to vector<8x256xf32>
    %c3 = arith.constant 3 : index
    %c0_14 = arith.constant 0 : index
    %c0_15 = arith.constant 0 : index
    %20 = vector.load %arg4[%c3, %c0_14, %c0_15] : memref<9x8x8xf32, #tpu.memory_space<vmem>>, vector<1x8x8xf32>
    %21 = vector.shape_cast %20 : vector<1x8x8xf32> to vector<8x8xf32>
    %cst_16 = arith.constant dense<0.000000e+00> : vector<8x256xf32>
    %22 = tpu.matmul %21, %19, %cst_16 {dimension_numbers = #tpu.dot_dimension_numbers<[1], [0], [0], [1], [0, 0, 1, 1], [], []>} : vector<8x8xf32>, vector<8x256xf32>, vector<8x256xf32> -> vector<8x256xf32>
    %23 = arith.addf %18, %22 : vector<8x256xf32>
    %24 = vector.extract_strided_slice %4 {offsets = [0, 17], sizes = [8, 256], strides = [1, 1]} : vector<8x384xf32> to vector<8x256xf32>
    %c4 = arith.constant 4 : index
    %c0_17 = arith.constant 0 : index
    %c0_18 = arith.constant 0 : index
    %25 = vector.load %arg4[%c4, %c0_17, %c0_18] : memref<9x8x8xf32, #tpu.memory_space<vmem>>, vector<1x8x8xf32>
    %26 = vector.shape_cast %25 : vector<1x8x8xf32> to vector<8x8xf32>
    %cst_19 = arith.constant dense<0.000000e+00> : vector<8x256xf32>
    %27 = tpu.matmul %26, %24, %cst_19 {dimension_numbers = #tpu.dot_dimension_numbers<[1], [0], [0], [1], [0, 0, 1, 1], [], []>} : vector<8x8xf32>, vector<8x256xf32>, vector<8x256xf32> -> vector<8x256xf32>
    %28 = arith.addf %23, %27 : vector<8x256xf32>
    %29 = vector.extract_strided_slice %4 {offsets = [0, 18], sizes = [8, 256], strides = [1, 1]} : vector<8x384xf32> to vector<8x256xf32>
    %c5 = arith.constant 5 : index
    %c0_20 = arith.constant 0 : index
    %c0_21 = arith.constant 0 : index
    %30 = vector.load %arg4[%c5, %c0_20, %c0_21] : memref<9x8x8xf32, #tpu.memory_space<vmem>>, vector<1x8x8xf32>
    %31 = vector.shape_cast %30 : vector<1x8x8xf32> to vector<8x8xf32>
    %cst_22 = arith.constant dense<0.000000e+00> : vector<8x256xf32>
    %32 = tpu.matmul %31, %29, %cst_22 {dimension_numbers = #tpu.dot_dimension_numbers<[1], [0], [0], [1], [0, 0, 1, 1], [], []>} : vector<8x8xf32>, vector<8x256xf32>, vector<8x256xf32> -> vector<8x256xf32>
    %33 = arith.addf %28, %32 : vector<8x256xf32>
    %34 = vector.extract_strided_slice %4 {offsets = [0, 32], sizes = [8, 256], strides = [1, 1]} : vector<8x384xf32> to vector<8x256xf32>
    %c6 = arith.constant 6 : index
    %c0_23 = arith.constant 0 : index
    %c0_24 = arith.constant 0 : index
    %35 = vector.load %arg4[%c6, %c0_23, %c0_24] : memref<9x8x8xf32, #tpu.memory_space<vmem>>, vector<1x8x8xf32>
    %36 = vector.shape_cast %35 : vector<1x8x8xf32> to vector<8x8xf32>
    %cst_25 = arith.constant dense<0.000000e+00> : vector<8x256xf32>
    %37 = tpu.matmul %36, %34, %cst_25 {dimension_numbers = #tpu.dot_dimension_numbers<[1], [0], [0], [1], [0, 0, 1, 1], [], []>} : vector<8x8xf32>, vector<8x256xf32>, vector<8x256xf32> -> vector<8x256xf32>
    %38 = arith.addf %33, %37 : vector<8x256xf32>
    %39 = vector.extract_strided_slice %4 {offsets = [0, 33], sizes = [8, 256], strides = [1, 1]} : vector<8x384xf32> to vector<8x256xf32>
    %c7 = arith.constant 7 : index
    %c0_26 = arith.constant 0 : index
    %c0_27 = arith.constant 0 : index
    %40 = vector.load %arg4[%c7, %c0_26, %c0_27] : memref<9x8x8xf32, #tpu.memory_space<vmem>>, vector<1x8x8xf32>
    %41 = vector.shape_cast %40 : vector<1x8x8xf32> to vector<8x8xf32>
    %cst_28 = arith.constant dense<0.000000e+00> : vector<8x256xf32>
    %42 = tpu.matmul %41, %39, %cst_28 {dimension_numbers = #tpu.dot_dimension_numbers<[1], [0], [0], [1], [0, 0, 1, 1], [], []>} : vector<8x8xf32>, vector<8x256xf32>, vector<8x256xf32> -> vector<8x256xf32>
    %43 = arith.addf %38, %42 : vector<8x256xf32>
    %44 = vector.extract_strided_slice %4 {offsets = [0, 34], sizes = [8, 256], strides = [1, 1]} : vector<8x384xf32> to vector<8x256xf32>
    %c8 = arith.constant 8 : index
    %c0_29 = arith.constant 0 : index
    %c0_30 = arith.constant 0 : index
    %45 = vector.load %arg4[%c8, %c0_29, %c0_30] : memref<9x8x8xf32, #tpu.memory_space<vmem>>, vector<1x8x8xf32>
    %46 = vector.shape_cast %45 : vector<1x8x8xf32> to vector<8x8xf32>
    %cst_31 = arith.constant dense<0.000000e+00> : vector<8x256xf32>
    %47 = tpu.matmul %46, %44, %cst_31 {dimension_numbers = #tpu.dot_dimension_numbers<[1], [0], [0], [1], [0, 0, 1, 1], [], []>} : vector<8x8xf32>, vector<8x256xf32>, vector<8x256xf32> -> vector<8x256xf32>
    %48 = arith.addf %43, %47 : vector<8x256xf32>
    %c0_32 = arith.constant 0 : index
    %c0_33 = arith.constant 0 : index
    %c0_34 = arith.constant 0 : index
    %49 = vector.load %arg6[%c0_32, %c0_33, %c0_34] : memref<1x8x256xf32, #tpu.memory_space<vmem>>, vector<1x8x256xf32>
    %50 = vector.shape_cast %49 : vector<1x8x256xf32> to vector<8x256xf32>
    %51 = vector.shape_cast %48 : vector<8x256xf32> to vector<1x8x256xf32>
    tpu.vector_store %arg6[%c0_32, %c0_33, %c0_34], %51 {strides = array<i32>} : memref<1x8x256xf32, #tpu.memory_space<vmem>>, vector<1x8x256xf32>,
    %c0_35 = arith.constant 0 : index
    %c0_36 = arith.constant 0 : index
    %52 = vector.load %arg5[%c0_35, %c0_36] : memref<1x256xf32, #tpu.memory_space<vmem>>, vector<1x256xf32>
    %53 = vector.broadcast %52 : vector<1x256xf32> to vector<8x256xf32>
    %54 = arith.mulf %48, %53 : vector<8x256xf32>
    %cst_37 = arith.constant 0.000000e+00 : f32
    %55 = vector.broadcast %cst_37 : f32 to vector<8x128xf32>
    %cst_38 = arith.constant 0.000000e+00 : f32
    %56 = vector.broadcast %cst_38 : f32 to vector<8x128xf32>
    %57 = vector.extract_strided_slice %54 {offsets = [0, 0], sizes = [8, 128], strides = [1, 1]} : vector<8x256xf32> to vector<8x128xf32>
    %58 = arith.addf %55, %57 : vector<8x128xf32>
    %59 = arith.mulf %57, %57 : vector<8x128xf32>
    %60 = arith.addf %56, %59 : vector<8x128xf32>
    %61 = vector.extract_strided_slice %54 {offsets = [0, 128], sizes = [8, 128], strides = [1, 1]} : vector<8x256xf32> to vector<8x128xf32>
    %62 = arith.addf %58, %61 : vector<8x128xf32>
    %63 = arith.mulf %61, %61 : vector<8x128xf32>
    %64 = arith.addf %60, %63 : vector<8x128xf32>
    %c0_39 = arith.constant 0 : index
    %c0_40 = arith.constant 0 : index
    %c0_41 = arith.constant 0 : index
    %c0_42 = arith.constant 0 : index
    %65 = vector.load %arg7[%c0_39, %c0_40, %c0_41, %c0_42] : memref<1x1x8x128xf32, #tpu.memory_space<vmem>>, vector<1x1x8x128xf32>
    %66 = vector.shape_cast %65 : vector<1x1x8x128xf32> to vector<8x128xf32>
    %67 = vector.shape_cast %62 : vector<8x128xf32> to vector<1x1x8x128xf32>
    tpu.vector_store %arg7[%c0_39, %c0_40, %c0_41, %c0_42], %67 {strides = array<i32>} : memref<1x1x8x128xf32, #tpu.memory_space<vmem>>, vector<1x1x8x128xf32>,
    %c0_43 = arith.constant 0 : index
    %c0_44 = arith.constant 0 : index
    %c0_45 = arith.constant 0 : index
    %c0_46 = arith.constant 0 : index
    %68 = vector.load %arg8[%c0_43, %c0_44, %c0_45, %c0_46] : memref<1x1x8x128xf32, #tpu.memory_space<vmem>>, vector<1x1x8x128xf32>
    %69 = vector.shape_cast %68 : vector<1x1x8x128xf32> to vector<8x128xf32>
    %70 = vector.shape_cast %64 : vector<8x128xf32> to vector<1x1x8x128xf32>
    tpu.vector_store %arg8[%c0_43, %c0_44, %c0_45, %c0_46], %70 {strides = array<i32>} : memref<1x1x8x128xf32, #tpu.memory_space<vmem>>, vector<1x1x8x128xf32>,
    return
  }
  func.func @transform_0(%arg0: i32, %arg1: i32) -> (i32, i32, i32) {
    %c0_i32 = arith.constant 0 : i32
    %c0_i32_0 = arith.constant 0 : i32
    return %arg0, %c0_i32, %arg1 : i32, i32, i32
  }
  func.func @transform_1(%arg0: i32, %arg1: i32) -> (i32, i32, i32) {
    %c1_i32 = arith.constant 1 : i32
    %0 = arith.addi %arg1, %c1_i32 : i32
    %c2_i32 = arith.constant 2 : i32
    %1 = arith.muli %0, %c2_i32 : i32
    %c0_i32 = arith.constant 0 : i32
    %c0_i32_0 = arith.constant 0 : i32
    return %arg0, %c0_i32, %1 : i32, i32, i32
  }
  func.func @transform_2(%arg0: i32, %arg1: i32) -> (i32, i32, i32) {
    %c0_i32 = arith.constant 0 : i32
    %c0_i32_0 = arith.constant 0 : i32
    %c0_i32_1 = arith.constant 0 : i32
    %c0_i32_2 = arith.constant 0 : i32
    return %c0_i32, %c0_i32_0, %c0_i32_1 : i32, i32, i32
  }
  func.func @transform_3(%arg0: i32, %arg1: i32) -> (i32, i32) {
    %c0_i32 = arith.constant 0 : i32
    %c0_i32_0 = arith.constant 0 : i32
    return %c0_i32, %arg1 : i32, i32
  }
  func.func @transform_4(%arg0: i32, %arg1: i32) -> (i32, i32, i32) {
    %c0_i32 = arith.constant 0 : i32
    %c0_i32_0 = arith.constant 0 : i32
    return %arg0, %c0_i32, %arg1 : i32, i32, i32
  }
  func.func @transform_5(%arg0: i32, %arg1: i32) -> (i32, i32, i32, i32) {
    %c0_i32 = arith.constant 0 : i32
    %c0_i32_0 = arith.constant 0 : i32
    %c0_i32_1 = arith.constant 0 : i32
    return %arg0, %arg1, %c0_i32, %c0_i32_0 : i32, i32, i32, i32
  }
  func.func @transform_6(%arg0: i32, %arg1: i32) -> (i32, i32, i32, i32) {
    %c0_i32 = arith.constant 0 : i32
    %c0_i32_0 = arith.constant 0 : i32
    %c0_i32_1 = arith.constant 0 : i32
    return %arg0, %arg1, %c0_i32, %c0_i32_0 : i32, i32, i32, i32
  }
}

</mosaic_0001>

<llo_original>
// kernel: tpu_custom_call.1
$region0: #{tpu_custom_call.1}
  #allocation0 [shape = 'u32[]', space=smem, size = 0x4, offset = 0x4, fixed_abs, tag = 'smem constant byte address 0x4 - core index']
  #allocation1 [shape = 'u32[144,128]{1,0:T(1,128)}', space=vmem, size = 0x12000, scoped, tag = 'internal scratch']
  %s0 = inlined_call_operand.vmem [shape: f32[2,8,384], index: 0, kind: input, shape index: {}]
  %s1 = inlined_call_operand.vmem [shape: f32[2,8,384], index: 1, kind: input, shape index: {}]
  %s2 = inlined_call_operand.vmem [shape: f32[9,8,8], index: 2, kind: input, shape index: {}]
  %s3 = inlined_call_operand.vmem [shape: f32[1,256], index: 3, kind: input, shape index: {}]
  %s4 = inlined_call_operand.hbm [shape: f32[2,8,256], index: 4, kind: output, shape index: {0}]
  %s5 = inlined_call_operand.hbm [shape: f32[2,1,8,128], index: 5, kind: output, shape index: {1}]
  %s6 = inlined_call_operand.hbm [shape: f32[2,1,8,128], index: 6, kind: output, shape index: {2}]
  %7 = xla_tuple %s4, %s5, %s6
  %s8 = sld [smem:[#allocation0]]
  $region65: #{tpu_custom_call.1} parent=0
    _
  %s10 = ssub.s32 1, %s8
  %s11 = scalar_select 0, %s10, %s8
  $region1: #{tpu_custom_call.1} parent=0
    #allocation2 [shape = 'u8[16384]{0}', space=vmem, size = 0x4000, scoped, tag = 'output window, operand 0']
    #allocation3 [shape = 's32[2]{0}', space=sflag, size = 0x8, scoped, tag = 'scoped memory for tpu_custom_call.1']
    #allocation4 [shape = 'u8[8192]{0}', space=vmem, size = 0x2000, scoped, tag = 'output window, operand 1']
    #allocation5 [shape = 's32[2]{0}', space=sflag, size = 0x8, scoped, tag = 'scoped memory for tpu_custom_call.1']
    #allocation6 [shape = 'u8[8192]{0}', space=vmem, size = 0x2000, scoped, tag = 'output window, operand 2']
    %12 = vsyncpa [#allocation3], 0
    %s13 = scalar_lea.sflag [#allocation3], 1
    %14 = vsyncpa %s13, 0
    %15 = vsyncpa [#allocation5], 0
    %s16 = scalar_lea.sflag [#allocation5], 1
    %17 = vsyncpa %s16, 0
    loop: start=0, step=1, limit=4
    $region2: #{tpu_custom_call.1} parent=1 // loop_pre_header
      _
    $region3: #{tpu_custom_call.1} parent=1 // loop_header
      %s19 = sphi 0, %s23
      %p20 = scmp.ge.s32.totalorder %s19, 4
      %s26 = sphi 0, %s38
      %s27 = sphi 0, %s34
      %s28 = sphi 0, %s26
      %s29 = sphi 0, %s27
      %s30 = sphi 0, %s28
      %s31 = sphi 0, %s29
      %s43 = sphi 0, %s45
      %s46 = sphi 0, %s43
      %s47 = sphi 0, %s46
      %s63 = sphi 0, %s47
      %s75 = sphi 0, %s77
      %s78 = sphi 0, %s75
      %s79 = sphi 0, %s78
      %s95 = sphi 0, %s79
      %s99 = sphi 0, %s99
      %s101 = sphi 0, %s99
      %s102 = sphi 0, %s101
      %s116 = sphi 0, %s102
      %s122 = sphi 0, %s124
      %s125 = sphi 0, %s122
      %s126 = sphi 0, %s125
      %s142 = sphi 0, %s126
      %s150 = sphi 0, %s152
      %s153 = sphi 0, %s150
      %s154 = sphi 0, %s153
      %s170 = sphi 0, %s154
      %s178 = sphi 0, %s180
      %s181 = sphi 0, %s178
      %s182 = sphi 0, %s181
      %s198 = sphi 0, %s182
      %s206 = sphi 0, %s208
      %s209 = sphi 0, %s206
      %s210 = sphi 0, %s209
      %s226 = sphi 0, %s210
    $region4: #{tpu_custom_call.1} parent=1 // loop_header_branch
      %22 = sbr.rel (%p20) target = $region8
    $region5: #{tpu_custom_call.1} parent=1 // loop_body
      %s24 = ssub.s32 %s19, 1
      %s25 = ssub.s32 %s19, 2
      %s32 = sadd.s32 1, %s27
      %p33 = scmp.ge.s32.totalorder %s32, 1
      %s34 = scalar_select %p33, 0, %s32
      %s35 = sadd.s32 1, %s26
      %s36 = scalar_select %p33, %s35, %s26
      %p37 = scmp.ge.s32.totalorder %s36, 2
      %s38 = scalar_select %p37, 0, %s36
      %s39 = ssub.s32 %s26, %s38
      %s40 = ssub.s32 %s27, %s34
      %s41 = sor.u32 %s39, %s40
      %p42 = scmp.eq.s32.totalorder %s41, 0
      %s44 = sadd.s32 %s43, 1
      %s45 = scalar_select %p42, %s43, %s44
      %p48 = pneg %p42
      %p49 = scmp.eq.s32.totalorder %s19, 1
      %p50 = por %p48, %p49
      %p51 = scmp.ne.s32.totalorder %s43, %s46
      %p52 = scmp.eq.s32.totalorder %s19, 0
      %p53 = por %p51, %p52
      %p54 = scmp.ne.s32.totalorder %s43, %s46
      %p55 = scmp.eq.s32.totalorder %s24, 1
      %p56 = por %p54, %p55
      %p57 = scmp.ne.s32.totalorder %s46, %s47
      %p58 = scmp.eq.s32.totalorder %s24, 0
      %p59 = por %p57, %p58
      %p60 = scmp.ne.s32.totalorder %s46, %s47
      %p61 = scmp.eq.s32.totalorder %s25, 1
      %p62 = por %p60, %p61
      %p64 = scmp.ne.s32.totalorder %s47, %s63
      %p65 = scmp.eq.s32.totalorder %s25, 0
      %p66 = por %p64, %p65
      %s67 = sadd.s32 %s27, 1
      %s68 = smul.u32 %s67, 2
      %s69 = sadd.s32 %s34, 1
      %s70 = smul.u32 %s69, 2
      %s71 = ssub.s32 %s26, %s38
      %s72 = ssub.s32 %s68, %s70
      %s73 = sor.u32 %s71, %s72
      %p74 = scmp.eq.s32.totalorder %s73, 0
      %s76 = sadd.s32 %s75, 1
      %s77 = scalar_select %p74, %s75, %s76
      %p80 = pneg %p74
      %p81 = scmp.eq.s32.totalorder %s19, 1
      %p82 = por %p80, %p81
      %p83 = scmp.ne.s32.totalorder %s75, %s78
      %p84 = scmp.eq.s32.totalorder %s19, 0
      %p85 = por %p83, %p84
      %p86 = scmp.ne.s32.totalorder %s75, %s78
      %p87 = scmp.eq.s32.totalorder %s24, 1
      %p88 = por %p86, %p87
      %p89 = scmp.ne.s32.totalorder %s78, %s79
      %p90 = scmp.eq.s32.totalorder %s24, 0
      %p91 = por %p89, %p90
      %p92 = scmp.ne.s32.totalorder %s78, %s79
      %p93 = scmp.eq.s32.totalorder %s25, 1
      %p94 = por %p92, %p93
      %p96 = scmp.ne.s32.totalorder %s79, %s95
      %p97 = scmp.eq.s32.totalorder %s25, 0
      %p98 = por %p96, %p97
      %s100 = sadd.s32 %s99, 1
      %p103 = scmp.eq.s32.totalorder %s19, 1
      %p104 = scmp.ne.s32.totalorder %s99, %s101
      %p105 = scmp.eq.s32.totalorder %s19, 0
      %p106 = por %p104, %p105
      %p107 = scmp.ne.s32.totalorder %s99, %s101
      %p108 = scmp.eq.s32.totalorder %s24, 1
      %p109 = por %p107, %p108
      %p110 = scmp.ne.s32.totalorder %s101, %s102
      %p111 = scmp.eq.s32.totalorder %s24, 0
      %p112 = por %p110, %p111
      %p113 = scmp.ne.s32.totalorder %s101, %s102
      %p114 = scmp.eq.s32.totalorder %s25, 1
      %p115 = por %p113, %p114
      %p117 = scmp.ne.s32.totalorder %s102, %s116
      %p118 = scmp.eq.s32.totalorder %s25, 0
      %p119 = por %p117, %p118
      %s120 = ssub.s32 %s27, %s34
      %p121 = scmp.eq.s32.totalorder %s120, 0
      %s123 = sadd.s32 %s122, 1
      %s124 = scalar_select %p121, %s122, %s123
      %p127 = pneg %p121
      %p128 = scmp.eq.s32.totalorder %s19, 1
      %p129 = por %p127, %p128
      %p130 = scmp.ne.s32.totalorder %s122, %s125
      %p131 = scmp.eq.s32.totalorder %s19, 0
      %p132 = por %p130, %p131
      %p133 = scmp.ne.s32.totalorder %s122, %s125
      %p134 = scmp.eq.s32.totalorder %s24, 1
      %p135 = por %p133, %p134
      %p136 = scmp.ne.s32.totalorder %s125, %s126
      %p137 = scmp.eq.s32.totalorder %s24, 0
      %p138 = por %p136, %p137
      %p139 = scmp.ne.s32.totalorder %s125, %s126
      %p140 = scmp.eq.s32.totalorder %s25, 1
      %p141 = por %p139, %p140
      %p143 = scmp.ne.s32.totalorder %s126, %s142
      %p144 = scmp.eq.s32.totalorder %s25, 0
      %p145 = por %p143, %p144
      %s146 = ssub.s32 %s26, %s38
      %s147 = ssub.s32 %s27, %s34
      %s148 = sor.u32 %s146, %s147
      %p149 = scmp.eq.s32.totalorder %s148, 0
      %s151 = sadd.s32 %s150, 1
      %s152 = scalar_select %p149, %s150, %s151
      %p155 = pneg %p149
      %p156 = scmp.eq.s32.totalorder %s19, 1
      %p157 = por %p155, %p156
      %p158 = scmp.ne.s32.totalorder %s150, %s153
      %p159 = scmp.eq.s32.totalorder %s19, 0
      %p160 = por %p158, %p159
      %p161 = scmp.ne.s32.totalorder %s150, %s153
      %p162 = scmp.eq.s32.totalorder %s24, 1
      %p163 = por %p161, %p162
      %p164 = scmp.ne.s32.totalorder %s153, %s154
      %p165 = scmp.eq.s32.totalorder %s24, 0
      %p166 = por %p164, %p165
      %p167 = scmp.ne.s32.totalorder %s153, %s154
      %p168 = scmp.eq.s32.totalorder %s25, 1
      %p169 = por %p167, %p168
      %p171 = scmp.ne.s32.totalorder %s154, %s170
      %p172 = scmp.eq.s32.totalorder %s25, 0
      %p173 = por %p171, %p172
      %s174 = ssub.s32 %s26, %s38
      %s175 = ssub.s32 %s27, %s34
      %s176 = sor.u32 %s174, %s175
      %p177 = scmp.eq.s32.totalorder %s176, 0
      %s179 = sadd.s32 %s178, 1
      %s180 = scalar_select %p177, %s178, %s179
      %p183 = pneg %p177
      %p184 = scmp.eq.s32.totalorder %s19, 1
      %p185 = por %p183, %p184
      %p186 = scmp.ne.s32.totalorder %s178, %s181
      %p187 = scmp.eq.s32.totalorder %s19, 0
      %p188 = por %p186, %p187
      %p189 = scmp.ne.s32.totalorder %s178, %s181
      %p190 = scmp.eq.s32.totalorder %s24, 1
      %p191 = por %p189, %p190
      %p192 = scmp.ne.s32.totalorder %s181, %s182
      %p193 = scmp.eq.s32.totalorder %s24, 0
      %p194 = por %p192, %p193
      %p195 = scmp.ne.s32.totalorder %s181, %s182
      %p196 = scmp.eq.s32.totalorder %s25, 1
      %p197 = por %p195, %p196
      %p199 = scmp.ne.s32.totalorder %s182, %s198
      %p200 = scmp.eq.s32.totalorder %s25, 0
      %p201 = por %p199, %p200
      %s202 = ssub.s32 %s26, %s38
      %s203 = ssub.s32 %s27, %s34
      %s204 = sor.u32 %s202, %s203
      %p205 = scmp.eq.s32.totalorder %s204, 0
      %s207 = sadd.s32 %s206, 1
      %s208 = scalar_select %p205, %s206, %s207
      %p211 = pneg %p205
      %p212 = scmp.eq.s32.totalorder %s19, 1
      %p213 = por %p211, %p212
      %p214 = scmp.ne.s32.totalorder %s206, %s209
      %p215 = scmp.eq.s32.totalorder %s19, 0
      %p216 = por %p214, %p215
      %p217 = scmp.ne.s32.totalorder %s206, %s209
      %p218 = scmp.eq.s32.totalorder %s24, 1
      %p219 = por %p217, %p218
      %p220 = scmp.ne.s32.totalorder %s209, %s210
      %p221 = scmp.eq.s32.totalorder %s24, 0
      %p222 = por %p220, %p221
      %p223 = scmp.ne.s32.totalorder %s209, %s210
      %p224 = scmp.eq.s32.totalorder %s25, 1
      %p225 = por %p223, %p224
      %p227 = scmp.ne.s32.totalorder %s210, %s226
      %p228 = scmp.eq.s32.totalorder %s25, 0
      %p229 = por %p227, %p228
      %p230 = scmp.le.s32.totalorder 1, %s19
      %p231 = scmp.lt.s32.totalorder %s19, 3
      %p232 = pnand %p230, %p231
      %p233 = pneg %p232
      // Predicated region
      $region9: #{tpu_custom_call.1} parent=5 // pred_check
        _
      $region10: #{tpu_custom_call.1} parent=5 // pred_check_branch
        %235 = sbr.rel (%p232) target = $region12
      $region11: #{tpu_custom_call.1} parent=5 // pred_region
        %s236 = ssub.s32 %s19, 1
        // Predicated region
        $region13: #{tpu_custom_call.1} parent=11 // pred_check
          %p237 = pneg %p112
        $region14: #{tpu_custom_call.1} parent=11 // pred_check_branch
          %239 = sbr.rel (%p237) target = $region16
        $region15: #{tpu_custom_call.1} parent=11 // pred_region
          _
        $region16: #{tpu_custom_call.1} parent=11 // pred_fallthru
          _
        // Predicated region
        $region17: #{tpu_custom_call.1} parent=11 // pred_check
          %p240 = pneg %p138
        $region18: #{tpu_custom_call.1} parent=11 // pred_check_branch
          %242 = sbr.rel (%p240) target = $region20
        $region19: #{tpu_custom_call.1} parent=11 // pred_region
          %s243 = smul.u32 2, %s29
          %p244 = scmp.lt.s32.totalorder %s243, 1
          %s245 = scalar_select %p244, %s243, 1
          %s246 = scalar_lea.vmem %s3, %s245
          %s247 = smul.u32 2, %s29
        $region20: #{tpu_custom_call.1} parent=11 // pred_fallthru
          _
      $region12: #{tpu_custom_call.1} parent=5 // pred_fallthru
        _
      %p248 = scmp.lt.s32.totalorder %s19, 2
      // Predicated region
      $region21: #{tpu_custom_call.1} parent=5 // pred_check
        %p249 = pneg %p248
      $region22: #{tpu_custom_call.1} parent=5 // pred_check_branch
        %251 = sbr.rel (%p249) target = $region24
      $region23: #{tpu_custom_call.1} parent=5 // pred_region
        // Predicated region
        $region25: #{tpu_custom_call.1} parent=23 // pred_check
          %p252 = pneg %p53
        $region26: #{tpu_custom_call.1} parent=23 // pred_check_branch
          %254 = sbr.rel (%p252) target = $region28
        $region27: #{tpu_custom_call.1} parent=23 // pred_region
          %s255 = smul.u32 2, %s27
          %s256 = ssub.s32 3, %s255
          %p257 = scmp.lt.s32.totalorder %s256, 2
          %s258 = scalar_select %p257, %s256, 2
          %s259 = smul.u32 128, %s258
          %p260 = scmp.lt.s32.totalorder %s26, 1
          %s261 = scalar_select %p260, %s26, 1
          %p262 = scmp.lt.s32.totalorder %s255, 2
          %s263 = scalar_select %p262, %s255, 2
          %s264 = smul.addr %s261, 3
          %s265 = sadd.s32 %s263, %s264
          %s266 = smul.addr %s265, 8
          %s267 = scalar_lea.vmem %s0, %s266
          %s268 = smul.u32 2, %s27
          %s269 = ssub.s32 3, %s268
          %p270 = scmp.lt.s32.totalorder %s269, 2
          %s271 = scalar_select %p270, %s269, 2
          %s272 = smul.u32 128, %s271
        $region28: #{tpu_custom_call.1} parent=23 // pred_fallthru
          _
        // Predicated region
        $region29: #{tpu_custom_call.1} parent=23 // pred_check
          %p273 = pneg %p85
        $region30: #{tpu_custom_call.1} parent=23 // pred_check_branch
          %275 = sbr.rel (%p273) target = $region32
        $region31: #{tpu_custom_call.1} parent=23 // pred_region
          %s276 = sadd.s32 %s27, 1
          %s277 = smul.u32 %s276, 2
          %p278 = scmp.lt.s32.totalorder %s26, 1
          %s279 = scalar_select %p278, %s26, 1
          %p280 = scmp.lt.s32.totalorder %s277, 2
          %s281 = scalar_select %p280, %s277, 2
          %s282 = smul.addr %s279, 3
          %s283 = sadd.s32 %s281, %s282
          %s284 = smul.addr %s283, 8
          %s285 = scalar_lea.vmem %s1, %s284
          %s286 = sadd.s32 %s27, 1
          %s287 = smul.u32 %s286, 2
        $region32: #{tpu_custom_call.1} parent=23 // pred_fallthru
          _
      $region24: #{tpu_custom_call.1} parent=5 // pred_fallthru
        _
      %p288 = scmp.le.s32.totalorder 1, %s19
      %p289 = scmp.lt.s32.totalorder %s19, 3
      %p290 = pnand %p288, %p289
      %p291 = pneg %p290
      // Predicated region
      $region33: #{tpu_custom_call.1} parent=5 // pred_check
        _
      $region34: #{tpu_custom_call.1} parent=5 // pred_check_branch
        %293 = sbr.rel (%p290) target = $region36
      $region35: #{tpu_custom_call.1} parent=5 // pred_region
        %s294 = ssub.s32 %s19, 1
        %s295 = smul.u32 2, %s29
        %s296 = ssub.s32 3, %s295
        %p297 = scmp.lt.s32.totalorder %s296, 2
        %s298 = scalar_select %p297, %s296, 2
        %s299 = smul.u32 128, %s298
        %p300 = scmp.lt.s32.totalorder %s28, 1
        %s301 = scalar_select %p300, %s28, 1
        %p302 = scmp.lt.s32.totalorder %s295, 2
        %s303 = scalar_select %p302, %s295, 2
        %s304 = smul.addr %s301, 3
        %s305 = sadd.s32 %s303, %s304
        %s306 = smul.addr %s305, 8
        %s307 = scalar_lea.vmem %s0, %s306
        %p308 = pneg %p59
        %p309 = pneg %p56
        %s310 = sadd.s32 %s29, 1
        %s311 = smul.u32 %s310, 2
        %p312 = scmp.lt.s32.totalorder %s28, 1
        %s313 = scalar_select %p312, %s28, 1
        %p314 = scmp.lt.s32.totalorder %s311, 2
        %s315 = scalar_select %p314, %s311, 2
        %s316 = smul.addr %s313, 3
        %s317 = sadd.s32 %s315, %s316
        %s318 = smul.addr %s317, 8
        %s319 = scalar_lea.vmem %s1, %s318
        %p320 = pneg %p91
        %p321 = pneg %p88
        %p322 = pneg %p112
        %p323 = pneg %p109
        %s324 = smul.u32 2, %s29
        %p325 = scmp.lt.s32.totalorder %s324, 1
        %s326 = scalar_select %p325, %s324, 1
        %s327 = scalar_lea.vmem %s3, %s326
        %p328 = pneg %p138
        %p329 = pneg %p135
        %p330 = pneg %p166
        %p331 = pneg %p163
        %s332 = sand.u32 %s153, 1
        %s333 = scalar_lea.sflag [#allocation3], %s332
        %s334 = sand.u32 %s153, 1
        %s335 = smul.addr %s334, 16
        %s336 = scalar_lea.vmem [#allocation2], %s335
        %p337 = pneg %p194
        %p338 = pneg %p191
        %s339 = sand.u32 %s24, 1
        %s340 = scalar_lea.sflag [#allocation5], %s339
        %s341 = sand.u32 %s181, 1
        %s342 = smul.addr %s341, 8
        %s343 = scalar_lea.vmem [#allocation4], %s342
        %p344 = pneg %p222
        %p345 = pneg %p219
        %s346 = sand.u32 %s24, 1
        %s347 = scalar_lea.sflag [#allocation5], %s346
        %s348 = sand.u32 %s209, 1
        %s349 = smul.addr %s348, 8
        %s350 = scalar_lea.vmem [#allocation6], %s349
        %s351 = smul.u32 2, %s29
        %s352 = ssub.s32 3, %s351
        %p353 = scmp.lt.s32.totalorder %s352, 2
        %s354 = scalar_select %p353, %s352, 2
        %s355 = smul.u32 128, %s354
        %p356 = scmp.lt.s32.totalorder %s28, 1
        %s357 = scalar_select %p356, %s28, 1
        %p358 = scmp.lt.s32.totalorder %s351, 2
        %s359 = scalar_select %p358, %s351, 2
        %s360 = smul.addr %s357, 3
        %s361 = sadd.s32 %s359, %s360
        %s362 = smul.addr %s361, 8
        %s363 = scalar_lea.vmem %s0, %s362
        %s364 = smul.u32 2, %s29
        %s365 = ssub.s32 3, %s364
        %p366 = scmp.lt.s32.totalorder %s365, 2
        %s367 = scalar_select %p366, %s365, 2
        %s368 = smul.u32 128, %s367
        %s369 = sadd.s32 %s29, 1
        %s370 = smul.u32 %s369, 2
        %p371 = scmp.lt.s32.totalorder %s28, 1
        %s372 = scalar_select %p371, %s28, 1
        %p373 = scmp.lt.s32.totalorder %s370, 2
        %s374 = scalar_select %p373, %s370, 2
        %s375 = smul.addr %s372, 3
        %s376 = sadd.s32 %s374, %s375
        %s377 = smul.addr %s376, 8
        %s378 = scalar_lea.vmem %s1, %s377
        %s379 = sadd.s32 %s29, 1
        %s380 = smul.u32 %s379, 2
        %s381 = smul.u32 2, %s29
        %p382 = scmp.lt.s32.totalorder %s381, 1
        %s383 = scalar_select %p382, %s381, 1
        %s384 = scalar_lea.vmem %s3, %s383
        %s385 = smul.u32 2, %s29
        %s386 = smul.u32 2, %s29
        %v387 = vld [vmem:[%s363] sm:$0xff]
        %v388 = vld [vmem:[%s363 + $0x8] sm:$0xff]
        %v389 = vld [vmem:[%s378] sm:$0xff]
        %v390 = vld [vmem:[%s2] sm:$0xff]
        %s391 = scalar_lea.vmem %s2, 8
        %v392 = vld [vmem:[%s391] sm:$0xff]
        %396 = vrot.lane.b32.xlu0 %v387, 127
        %v397 = vpop.permute.xlu0 %396
        %398 = vrot.lane.b32.xlu0 %v388, 127
        %v399 = vpop.permute.xlu0 %398
        %400 = vrot.lane.b32.xlu0 %v389, 127
        %v401 = vpop.permute.xlu0 %400
        %vm402 = vcmask 1039360
        %v403 = vsel %vm402, %v397, %v399
        %v404 = vsel %vm402, %v399, %v401
        %vm407 = vcmask 64512
        %v409 = vsel %vm407, %v392, 0
        %411 = vmatprep.subr.mxu0 %v404
        %412 = vmatpush1.msra.mxu0 %v403
        %413 = vmatprep.subr.mxu0 0.0
        %414 = vmatpush1.msra.mxu0 0.0
        %415 = vmatprep.subr.mxu0 0.0
        %416 = vmatpush1.msra.mxu0 0.0
        %417 = vmatprep.subr.mxu0 0.0
        %418 = vmatpush1.msra.mxu0 0.0
        %419 = vmatprep.subr.mxu0 0.0
        %420 = vmatpush1.msra.mxu0 0.0
        %421 = vmatprep.subr.mxu0 0.0
        %422 = vmatpush1.msra.mxu0 0.0
        %423 = vmatprep.subr.mxu0 0.0
        %424 = vmatpush1.msra.mxu0 0.0
        %425 = vmatprep.subr.mxu0 0.0
        %426 = vmatpush1.msra.mxu0 0.0
        %427 = vmatprep.subr.mxu0 0.0
        %428 = vmatpush1.msra.mxu0 0.0
        %429 = vmatprep.subr.mxu0 0.0
        %430 = vmatpush1.msra.mxu0 0.0
        %431 = vmatprep.subr.mxu0 0.0
        %432 = vmatpush1.msra.mxu0 0.0
        %433 = vmatprep.subr.mxu0 0.0
        %434 = vmatpush1.msra.mxu0 0.0
        %435 = vmatprep.subr.mxu0 0.0
        %436 = vmatpush1.msra.mxu0 0.0
        %437 = vmatprep.subr.mxu0 0.0
        %438 = vmatpush1.msra.mxu0 0.0
        %439 = vmatprep.subr.mxu0 0.0
        %440 = vmatpush1.msra.mxu0 0.0
        %441 = vmatprep.subr.mxu0 0.0
        %442 = vmatpush1.msra.mxu0 0.0
        %443 = vmatprep.subr.mxu0 0.0
        %444 = vmatpush1.msra.mxu0 0.0
        %445 = vmatprep.subr.mxu0 0.0
        %446 = vmatpush1.msra.mxu0 0.0
        %447 = vmatprep.subr.mxu0 0.0
        %448 = vmatpush1.msra.mxu0 0.0
        %449 = vmatprep.subr.mxu0 0.0
        %450 = vmatpush1.msra.mxu0 0.0
        %451 = vmatprep.subr.mxu0 0.0
        %452 = vmatpush1.msra.mxu0 0.0
        %453 = vmatprep.subr.mxu0 0.0
        %454 = vmatpush1.msra.mxu0 0.0
        %455 = vmatprep.subr.mxu0 0.0
        %456 = vmatpush1.msra.mxu0 0.0
        %457 = vmatprep.subr.mxu0 0.0
        %458 = vmatpush1.msra.mxu0 0.0
        %459 = vmatprep.subr.mxu0 0.0
        %460 = vmatpush1.msra.mxu0 0.0
        %461 = vmatprep.subr.mxu0 0.0
        %462 = vmatpush1.msra.mxu0 0.0
        %463 = vmatprep.subr.mxu0 0.0
        %464 = vmatpush1.msra.mxu0 0.0
        %465 = vmatprep.subr.mxu0 0.0
        %466 = vmatpush1.msra.mxu0 0.0
        %467 = vmatprep.subr.mxu0 0.0
        %468 = vmatpush1.msra.mxu0 0.0
        %469 = vmatprep.subr.mxu0 0.0
        %470 = vmatpush1.msra.mxu0 0.0
        %471 = vmatprep.subr.mxu0 0.0
        %472 = vmatpush1.msra.mxu0 0.0
        %473 = vmatprep.subr.mxu0 0.0
        %474 = vmatpush1.msra.mxu0 0.0
        %475 = vmatprep.mubr.f32.mxu0 0.0
        %476 = vmatmul.mubr.f32.gmra.mrb[0].mxu0 %v409
        %v477 = vpop.f32.mrb[0].mxu0
        %v478 = vadd.f32 0.0, %v477
        %v479 = vpop.f32.mrb[0].mxu0
        %v480 = vadd.f32 0.0, %v479
        %481 = vdwg.mxu0
        %v483 = vsel %vm407, %v390, 0
        %485 = vmatprep.subr.mxu0 %v388
        %486 = vmatpush1.msra.mxu0 %v387
        %487 = vmatprep.subr.mxu0 0.0
        %488 = vmatpush1.msra.mxu0 0.0
        %489 = vmatprep.subr.mxu0 0.0
        %490 = vmatpush1.msra.mxu0 0.0
        %491 = vmatprep.subr.mxu0 0.0
        %492 = vmatpush1.msra.mxu0 0.0
        %493 = vmatprep.subr.mxu0 0.0
        %494 = vmatpush1.msra.mxu0 0.0
        %495 = vmatprep.subr.mxu0 0.0
        %496 = vmatpush1.msra.mxu0 0.0
        %497 = vmatprep.subr.mxu0 0.0
        %498 = vmatpush1.msra.mxu0 0.0
        %499 = vmatprep.subr.mxu0 0.0
        %500 = vmatpush1.msra.mxu0 0.0
        %501 = vmatprep.subr.mxu0 0.0
        %502 = vmatpush1.msra.mxu0 0.0
        %503 = vmatprep.subr.mxu0 0.0
        %504 = vmatpush1.msra.mxu0 0.0
        %505 = vmatprep.subr.mxu0 0.0
        %506 = vmatpush1.msra.mxu0 0.0
        %507 = vmatprep.subr.mxu0 0.0
        %508 = vmatpush1.msra.mxu0 0.0
        %509 = vmatprep.subr.mxu0 0.0
        %510 = vmatpush1.msra.mxu0 0.0
        %511 = vmatprep.subr.mxu0 0.0
        %512 = vmatpush1.msra.mxu0 0.0
        %513 = vmatprep.subr.mxu0 0.0
        %514 = vmatpush1.msra.mxu0 0.0
        %515 = vmatprep.subr.mxu0 0.0
        %516 = vmatpush1.msra.mxu0 0.0
        %517 = vmatprep.subr.mxu0 0.0
        %518 = vmatpush1.msra.mxu0 0.0
        %519 = vmatprep.subr.mxu0 0.0
        %520 = vmatpush1.msra.mxu0 0.0
        %521 = vmatprep.subr.mxu0 0.0
        %522 = vmatpush1.msra.mxu0 0.0
        %523 = vmatprep.subr.mxu0 0.0
        %524 = vmatpush1.msra.mxu0 0.0
        %525 = vmatprep.subr.mxu0 0.0
        %526 = vmatpush1.msra.mxu0 0.0
        %527 = vmatprep.subr.mxu0 0.0
        %528 = vmatpush1.msra.mxu0 0.0
        %529 = vmatprep.subr.mxu0 0.0
        %530 = vmatpush1.msra.mxu0 0.0
        %531 = vmatprep.subr.mxu0 0.0
        %532 = vmatpush1.msra.mxu0 0.0
        %533 = vmatprep.subr.mxu0 0.0
        %534 = vmatpush1.msra.mxu0 0.0
        %535 = vmatprep.subr.mxu0 0.0
        %536 = vmatpush1.msra.mxu0 0.0
        %537 = vmatprep.subr.mxu0 0.0
        %538 = vmatpush1.msra.mxu0 0.0
        %539 = vmatprep.subr.mxu0 0.0
        %540 = vmatpush1.msra.mxu0 0.0
        %541 = vmatprep.subr.mxu0 0.0
        %542 = vmatpush1.msra.mxu0 0.0
        %543 = vmatprep.subr.mxu0 0.0
        %544 = vmatpush1.msra.mxu0 0.0
        %545 = vmatprep.subr.mxu0 0.0
        %546 = vmatpush1.msra.mxu0 0.0
        %547 = vmatprep.subr.mxu0 0.0
        %548 = vmatpush1.msra.mxu0 0.0
        %549 = vmatprep.mubr.f32.mxu0 0.0
        %550 = vmatmul.mubr.f32.gmra.mrb[0].mxu0 %v483
        %v551 = vpop.f32.mrb[0].mxu0
        %v552 = vadd.f32 %v478, %v551
        %v553 = vpop.f32.mrb[0].mxu0
        %v554 = vadd.f32 %v480, %v553
        %555 = vdwg.mxu0
        %s556 = scalar_lea.vmem %s2, 16
        %v557 = vld [vmem:[%s556] sm:$0xff]
        %558 = vrot.lane.b32.xlu0 %v387, 126
        %v559 = vpop.permute.xlu0 %558
        %560 = vrot.lane.b32.xlu0 %v388, 126
        %v561 = vpop.permute.xlu0 %560
        %562 = vrot.lane.b32.xlu0 %v389, 126
        %v563 = vpop.permute.xlu0 %562
        %vm564 = vcmask 1031168
        %v565 = vsel %vm564, %v559, %v561
        %v566 = vsel %vm564, %v561, %v563
        %v570 = vsel %vm407, %v557, 0
        %572 = vmatprep.subr.mxu0 %v566
        %573 = vmatpush1.msra.mxu0 %v565
        %574 = vmatprep.subr.mxu0 0.0
        %575 = vmatpush1.msra.mxu0 0.0
        %576 = vmatprep.subr.mxu0 0.0
        %577 = vmatpush1.msra.mxu0 0.0
        %578 = vmatprep.subr.mxu0 0.0
        %579 = vmatpush1.msra.mxu0 0.0
        %580 = vmatprep.subr.mxu0 0.0
        %581 = vmatpush1.msra.mxu0 0.0
        %582 = vmatprep.subr.mxu0 0.0
        %583 = vmatpush1.msra.mxu0 0.0
        %584 = vmatprep.subr.mxu0 0.0
        %585 = vmatpush1.msra.mxu0 0.0
        %586 = vmatprep.subr.mxu0 0.0
        %587 = vmatpush1.msra.mxu0 0.0
        %588 = vmatprep.subr.mxu0 0.0
        %589 = vmatpush1.msra.mxu0 0.0
        %590 = vmatprep.subr.mxu0 0.0
        %591 = vmatpush1.msra.mxu0 0.0
        %592 = vmatprep.subr.mxu0 0.0
        %593 = vmatpush1.msra.mxu0 0.0
        %594 = vmatprep.subr.mxu0 0.0
        %595 = vmatpush1.msra.mxu0 0.0
        %596 = vmatprep.subr.mxu0 0.0
        %597 = vmatpush1.msra.mxu0 0.0
        %598 = vmatprep.subr.mxu0 0.0
        %599 = vmatpush1.msra.mxu0 0.0
        %600 = vmatprep.subr.mxu0 0.0
        %601 = vmatpush1.msra.mxu0 0.0
        %602 = vmatprep.subr.mxu0 0.0
        %603 = vmatpush1.msra.mxu0 0.0
        %604 = vmatprep.subr.mxu0 0.0
        %605 = vmatpush1.msra.mxu0 0.0
        %606 = vmatprep.subr.mxu0 0.0
        %607 = vmatpush1.msra.mxu0 0.0
        %608 = vmatprep.subr.mxu0 0.0
        %609 = vmatpush1.msra.mxu0 0.0
        %610 = vmatprep.subr.mxu0 0.0
        %611 = vmatpush1.msra.mxu0 0.0
        %612 = vmatprep.subr.mxu0 0.0
        %613 = vmatpush1.msra.mxu0 0.0
        %614 = vmatprep.subr.mxu0 0.0
        %615 = vmatpush1.msra.mxu0 0.0
        %616 = vmatprep.subr.mxu0 0.0
        %617 = vmatpush1.msra.mxu0 0.0
        %618 = vmatprep.subr.mxu0 0.0
        %619 = vmatpush1.msra.mxu0 0.0
        %620 = vmatprep.subr.mxu0 0.0
        %621 = vmatpush1.msra.mxu0 0.0
        %622 = vmatprep.subr.mxu0 0.0
        %623 = vmatpush1.msra.mxu0 0.0
        %624 = vmatprep.subr.mxu0 0.0
        %625 = vmatpush1.msra.mxu0 0.0
        %626 = vmatprep.subr.mxu0 0.0
        %627 = vmatpush1.msra.mxu0 0.0
        %628 = vmatprep.subr.mxu0 0.0
        %629 = vmatpush1.msra.mxu0 0.0
        %630 = vmatprep.subr.mxu0 0.0
        %631 = vmatpush1.msra.mxu0 0.0
        %632 = vmatprep.subr.mxu0 0.0
        %633 = vmatpush1.msra.mxu0 0.0
        %634 = vmatprep.subr.mxu0 0.0
        %635 = vmatpush1.msra.mxu0 0.0
        %636 = vmatprep.mubr.f32.mxu0 0.0
        %637 = vmatmul.mubr.f32.gmra.mrb[0].mxu0 %v570
        %v638 = vpop.f32.mrb[0].mxu0
        %v639 = vadd.f32 0.0, %v638
        %v640 = vpop.f32.mrb[0].mxu0
        %v641 = vadd.f32 0.0, %v640
        %642 = vdwg.mxu0
        %v643 = vadd.f32 %v552, %v639
        %v644 = vadd.f32 %v554, %v641
        %s645 = scalar_lea.vmem %s2, 24
        %v646 = vld [vmem:[%s645] sm:$0xff]
        %647 = vrot.lane.b32.xlu0 %v387, 112
        %v648 = vpop.permute.xlu0 %647
        %649 = vrot.lane.b32.xlu0 %v388, 112
        %v650 = vpop.permute.xlu0 %649
        %651 = vrot.lane.b32.xlu0 %v389, 112
        %v652 = vpop.permute.xlu0 %651
        %vm653 = vcmask 916480
        %v654 = vsel %vm653, %v648, %v650
        %v655 = vsel %vm653, %v650, %v652
        %v659 = vsel %vm407, %v646, 0
        %661 = vmatprep.subr.mxu0 %v655
        %662 = vmatpush1.msra.mxu0 %v654
        %663 = vmatprep.subr.mxu0 0.0
        %664 = vmatpush1.msra.mxu0 0.0
        %665 = vmatprep.subr.mxu0 0.0
        %666 = vmatpush1.msra.mxu0 0.0
        %667 = vmatprep.subr.mxu0 0.0
        %668 = vmatpush1.msra.mxu0 0.0
        %669 = vmatprep.subr.mxu0 0.0
        %670 = vmatpush1.msra.mxu0 0.0
        %671 = vmatprep.subr.mxu0 0.0
        %672 = vmatpush1.msra.mxu0 0.0
        %673 = vmatprep.subr.mxu0 0.0
        %674 = vmatpush1.msra.mxu0 0.0
        %675 = vmatprep.subr.mxu0 0.0
        %676 = vmatpush1.msra.mxu0 0.0
        %677 = vmatprep.subr.mxu0 0.0
        %678 = vmatpush1.msra.mxu0 0.0
        %679 = vmatprep.subr.mxu0 0.0
        %680 = vmatpush1.msra.mxu0 0.0
        %681 = vmatprep.subr.mxu0 0.0
        %682 = vmatpush1.msra.mxu0 0.0
        %683 = vmatprep.subr.mxu0 0.0
        %684 = vmatpush1.msra.mxu0 0.0
        %685 = vmatprep.subr.mxu0 0.0
        %686 = vmatpush1.msra.mxu0 0.0
        %687 = vmatprep.subr.mxu0 0.0
        %688 = vmatpush1.msra.mxu0 0.0
        %689 = vmatprep.subr.mxu0 0.0
        %690 = vmatpush1.msra.mxu0 0.0
        %691 = vmatprep.subr.mxu0 0.0
        %692 = vmatpush1.msra.mxu0 0.0
        %693 = vmatprep.subr.mxu0 0.0
        %694 = vmatpush1.msra.mxu0 0.0
        %695 = vmatprep.subr.mxu0 0.0
        %696 = vmatpush1.msra.mxu0 0.0
        %697 = vmatprep.subr.mxu0 0.0
        %698 = vmatpush1.msra.mxu0 0.0
        %699 = vmatprep.subr.mxu0 0.0
        %700 = vmatpush1.msra.mxu0 0.0
        %701 = vmatprep.subr.mxu0 0.0
        %702 = vmatpush1.msra.mxu0 0.0
        %703 = vmatprep.subr.mxu0 0.0
        %704 = vmatpush1.msra.mxu0 0.0
        %705 = vmatprep.subr.mxu0 0.0
        %706 = vmatpush1.msra.mxu0 0.0
        %707 = vmatprep.subr.mxu0 0.0
        %708 = vmatpush1.msra.mxu0 0.0
        %709 = vmatprep.subr.mxu0 0.0
        %710 = vmatpush1.msra.mxu0 0.0
        %711 = vmatprep.subr.mxu0 0.0
        %712 = vmatpush1.msra.mxu0 0.0
        %713 = vmatprep.subr.mxu0 0.0
        %714 = vmatpush1.msra.mxu0 0.0
        %715 = vmatprep.subr.mxu0 0.0
        %716 = vmatpush1.msra.mxu0 0.0
        %717 = vmatprep.subr.mxu0 0.0
        %718 = vmatpush1.msra.mxu0 0.0
        %719 = vmatprep.subr.mxu0 0.0
        %720 = vmatpush1.msra.mxu0 0.0
        %721 = vmatprep.subr.mxu0 0.0
        %722 = vmatpush1.msra.mxu0 0.0
        %723 = vmatprep.subr.mxu0 0.0
        %724 = vmatpush1.msra.mxu0 0.0
        %725 = vmatprep.mubr.f32.mxu0 0.0
        %726 = vmatmul.mubr.f32.gmra.mrb[0].mxu0 %v659
        %v727 = vpop.f32.mrb[0].mxu0
        %v728 = vadd.f32 0.0, %v727
        %v729 = vpop.f32.mrb[0].mxu0
        %v730 = vadd.f32 0.0, %v729
        %731 = vdwg.mxu0
        %v732 = vadd.f32 %v643, %v728
        %v733 = vadd.f32 %v644, %v730
        %s734 = scalar_lea.vmem %s2, 32
        %v735 = vld [vmem:[%s734] sm:$0xff]
        %736 = vrot.lane.b32.xlu0 %v387, 111
        %v737 = vpop.permute.xlu0 %736
        %738 = vrot.lane.b32.xlu0 %v388, 111
        %v739 = vpop.permute.xlu0 %738
        %740 = vrot.lane.b32.xlu0 %v389, 111
        %v741 = vpop.permute.xlu0 %740
        %vm742 = vcmask 908288
        %v743 = vsel %vm742, %v737, %v739
        %v744 = vsel %vm742, %v739, %v741
        %v748 = vsel %vm407, %v735, 0
        %750 = vmatprep.subr.mxu0 %v744
        %751 = vmatpush1.msra.mxu0 %v743
        %752 = vmatprep.subr.mxu0 0.0
        %753 = vmatpush1.msra.mxu0 0.0
        %754 = vmatprep.subr.mxu0 0.0
        %755 = vmatpush1.msra.mxu0 0.0
        %756 = vmatprep.subr.mxu0 0.0
        %757 = vmatpush1.msra.mxu0 0.0
        %758 = vmatprep.subr.mxu0 0.0
        %759 = vmatpush1.msra.mxu0 0.0
        %760 = vmatprep.subr.mxu0 0.0
        %761 = vmatpush1.msra.mxu0 0.0
        %762 = vmatprep.subr.mxu0 0.0
        %763 = vmatpush1.msra.mxu0 0.0
        %764 = vmatprep.subr.mxu0 0.0
        %765 = vmatpush1.msra.mxu0 0.0
        %766 = vmatprep.subr.mxu0 0.0
        %767 = vmatpush1.msra.mxu0 0.0
        %768 = vmatprep.subr.mxu0 0.0
        %769 = vmatpush1.msra.mxu0 0.0
        %770 = vmatprep.subr.mxu0 0.0
        %771 = vmatpush1.msra.mxu0 0.0
        %772 = vmatprep.subr.mxu0 0.0
        %773 = vmatpush1.msra.mxu0 0.0
        %774 = vmatprep.subr.mxu0 0.0
        %775 = vmatpush1.msra.mxu0 0.0
        %776 = vmatprep.subr.mxu0 0.0
        %777 = vmatpush1.msra.mxu0 0.0
        %778 = vmatprep.subr.mxu0 0.0
        %779 = vmatpush1.msra.mxu0 0.0
        %780 = vmatprep.subr.mxu0 0.0
        %781 = vmatpush1.msra.mxu0 0.0
        %782 = vmatprep.subr.mxu0 0.0
        %783 = vmatpush1.msra.mxu0 0.0
        %784 = vmatprep.subr.mxu0 0.0
        %785 = vmatpush1.msra.mxu0 0.0
        %786 = vmatprep.subr.mxu0 0.0
        %787 = vmatpush1.msra.mxu0 0.0
        %788 = vmatprep.subr.mxu0 0.0
        %789 = vmatpush1.msra.mxu0 0.0
        %790 = vmatprep.subr.mxu0 0.0
        %791 = vmatpush1.msra.mxu0 0.0
        %792 = vmatprep.subr.mxu0 0.0
        %793 = vmatpush1.msra.mxu0 0.0
        %794 = vmatprep.subr.mxu0 0.0
        %795 = vmatpush1.msra.mxu0 0.0
        %796 = vmatprep.subr.mxu0 0.0
        %797 = vmatpush1.msra.mxu0 0.0
        %798 = vmatprep.subr.mxu0 0.0
        %799 = vmatpush1.msra.mxu0 0.0
        %800 = vmatprep.subr.mxu0 0.0
        %801 = vmatpush1.msra.mxu0 0.0
        %802 = vmatprep.subr.mxu0 0.0
        %803 = vmatpush1.msra.mxu0 0.0
        %804 = vmatprep.subr.mxu0 0.0
        %805 = vmatpush1.msra.mxu0 0.0
        %806 = vmatprep.subr.mxu0 0.0
        %807 = vmatpush1.msra.mxu0 0.0
        %808 = vmatprep.subr.mxu0 0.0
        %809 = vmatpush1.msra.mxu0 0.0
        %810 = vmatprep.subr.mxu0 0.0
        %811 = vmatpush1.msra.mxu0 0.0
        %812 = vmatprep.subr.mxu0 0.0
        %813 = vmatpush1.msra.mxu0 0.0
        %814 = vmatprep.mubr.f32.mxu0 0.0
        %815 = vmatmul.mubr.f32.gmra.mrb[0].mxu0 %v748
        %v816 = vpop.f32.mrb[0].mxu0
        %v817 = vadd.f32 0.0, %v816
        %v818 = vpop.f32.mrb[0].mxu0
        %v819 = vadd.f32 0.0, %v818
        %820 = vdwg.mxu0
        %v821 = vadd.f32 %v732, %v817
        %v822 = vadd.f32 %v733, %v819
        %s823 = scalar_lea.vmem %s2, 40
        %v824 = vld [vmem:[%s823] sm:$0xff]
        %825 = vrot.lane.b32.xlu0 %v387, 110
        %v826 = vpop.permute.xlu0 %825
        %827 = vrot.lane.b32.xlu0 %v388, 110
        %v828 = vpop.permute.xlu0 %827
        %829 = vrot.lane.b32.xlu0 %v389, 110
        %v830 = vpop.permute.xlu0 %829
        %vm831 = vcmask 900096
        %v832 = vsel %vm831, %v826, %v828
        %v833 = vsel %vm831, %v828, %v830
        %v837 = vsel %vm407, %v824, 0
        %839 = vmatprep.subr.mxu0 %v833
        %840 = vmatpush1.msra.mxu0 %v832
        %841 = vmatprep.subr.mxu0 0.0
        %842 = vmatpush1.msra.mxu0 0.0
        %843 = vmatprep.subr.mxu0 0.0
        %844 = vmatpush1.msra.mxu0 0.0
        %845 = vmatprep.subr.mxu0 0.0
        %846 = vmatpush1.msra.mxu0 0.0
        %847 = vmatprep.subr.mxu0 0.0
        %848 = vmatpush1.msra.mxu0 0.0
        %849 = vmatprep.subr.mxu0 0.0
        %850 = vmatpush1.msra.mxu0 0.0
        %851 = vmatprep.subr.mxu0 0.0
        %852 = vmatpush1.msra.mxu0 0.0
        %853 = vmatprep.subr.mxu0 0.0
        %854 = vmatpush1.msra.mxu0 0.0
        %855 = vmatprep.subr.mxu0 0.0
        %856 = vmatpush1.msra.mxu0 0.0
        %857 = vmatprep.subr.mxu0 0.0
        %858 = vmatpush1.msra.mxu0 0.0
        %859 = vmatprep.subr.mxu0 0.0
        %860 = vmatpush1.msra.mxu0 0.0
        %861 = vmatprep.subr.mxu0 0.0
        %862 = vmatpush1.msra.mxu0 0.0
        %863 = vmatprep.subr.mxu0 0.0
        %864 = vmatpush1.msra.mxu0 0.0
        %865 = vmatprep.subr.mxu0 0.0
        %866 = vmatpush1.msra.mxu0 0.0
        %867 = vmatprep.subr.mxu0 0.0
        %868 = vmatpush1.msra.mxu0 0.0
        %869 = vmatprep.subr.mxu0 0.0
        %870 = vmatpush1.msra.mxu0 0.0
        %871 = vmatprep.subr.mxu0 0.0
        %872 = vmatpush1.msra.mxu0 0.0
        %873 = vmatprep.subr.mxu0 0.0
        %874 = vmatpush1.msra.mxu0 0.0
        %875 = vmatprep.subr.mxu0 0.0
        %876 = vmatpush1.msra.mxu0 0.0
        %877 = vmatprep.subr.mxu0 0.0
        %878 = vmatpush1.msra.mxu0 0.0
        %879 = vmatprep.subr.mxu0 0.0
        %880 = vmatpush1.msra.mxu0 0.0
        %881 = vmatprep.subr.mxu0 0.0
        %882 = vmatpush1.msra.mxu0 0.0
        %883 = vmatprep.subr.mxu0 0.0
        %884 = vmatpush1.msra.mxu0 0.0
        %885 = vmatprep.subr.mxu0 0.0
        %886 = vmatpush1.msra.mxu0 0.0
        %887 = vmatprep.subr.mxu0 0.0
        %888 = vmatpush1.msra.mxu0 0.0
        %889 = vmatprep.subr.mxu0 0.0
        %890 = vmatpush1.msra.mxu0 0.0
        %891 = vmatprep.subr.mxu0 0.0
        %892 = vmatpush1.msra.mxu0 0.0
        %893 = vmatprep.subr.mxu0 0.0
        %894 = vmatpush1.msra.mxu0 0.0
        %895 = vmatprep.subr.mxu0 0.0
        %896 = vmatpush1.msra.mxu0 0.0
        %897 = vmatprep.subr.mxu0 0.0
        %898 = vmatpush1.msra.mxu0 0.0
        %899 = vmatprep.subr.mxu0 0.0
        %900 = vmatpush1.msra.mxu0 0.0
        %901 = vmatprep.subr.mxu0 0.0
        %902 = vmatpush1.msra.mxu0 0.0
        %903 = vmatprep.mubr.f32.mxu0 0.0
        %904 = vmatmul.mubr.f32.gmra.mrb[0].mxu0 %v837
        %v905 = vpop.f32.mrb[0].mxu0
        %v906 = vadd.f32 0.0, %v905
        %v907 = vpop.f32.mrb[0].mxu0
        %v908 = vadd.f32 0.0, %v907
        %909 = vdwg.mxu0
        %v910 = vadd.f32 %v821, %v906
        %v911 = vadd.f32 %v822, %v908
        %s912 = scalar_lea.vmem %s2, 48
        %v913 = vld [vmem:[%s912] sm:$0xff]
        %914 = vrot.lane.b32.xlu0 %v387, 96
        %v915 = vpop.permute.xlu0 %914
        %916 = vrot.lane.b32.xlu0 %v388, 96
        %v917 = vpop.permute.xlu0 %916
        %918 = vrot.lane.b32.xlu0 %v389, 96
        %v919 = vpop.permute.xlu0 %918
        %vm920 = vcmask 785408
        %v921 = vsel %vm920, %v915, %v917
        %v922 = vsel %vm920, %v917, %v919
        %v926 = vsel %vm407, %v913, 0
        %928 = vmatprep.subr.mxu0 %v922
        %929 = vmatpush1.msra.mxu0 %v921
        %930 = vmatprep.subr.mxu0 0.0
        %931 = vmatpush1.msra.mxu0 0.0
        %932 = vmatprep.subr.mxu0 0.0
        %933 = vmatpush1.msra.mxu0 0.0
        %934 = vmatprep.subr.mxu0 0.0
        %935 = vmatpush1.msra.mxu0 0.0
        %936 = vmatprep.subr.mxu0 0.0
        %937 = vmatpush1.msra.mxu0 0.0
        %938 = vmatprep.subr.mxu0 0.0
        %939 = vmatpush1.msra.mxu0 0.0
        %940 = vmatprep.subr.mxu0 0.0
        %941 = vmatpush1.msra.mxu0 0.0
        %942 = vmatprep.subr.mxu0 0.0
        %943 = vmatpush1.msra.mxu0 0.0
        %944 = vmatprep.subr.mxu0 0.0
        %945 = vmatpush1.msra.mxu0 0.0
        %946 = vmatprep.subr.mxu0 0.0
        %947 = vmatpush1.msra.mxu0 0.0
        %948 = vmatprep.subr.mxu0 0.0
        %949 = vmatpush1.msra.mxu0 0.0
        %950 = vmatprep.subr.mxu0 0.0
        %951 = vmatpush1.msra.mxu0 0.0
        %952 = vmatprep.subr.mxu0 0.0
        %953 = vmatpush1.msra.mxu0 0.0
        %954 = vmatprep.subr.mxu0 0.0
        %955 = vmatpush1.msra.mxu0 0.0
        %956 = vmatprep.subr.mxu0 0.0
        %957 = vmatpush1.msra.mxu0 0.0
        %958 = vmatprep.subr.mxu0 0.0
        %959 = vmatpush1.msra.mxu0 0.0
        %960 = vmatprep.subr.mxu0 0.0
        %961 = vmatpush1.msra.mxu0 0.0
        %962 = vmatprep.subr.mxu0 0.0
        %963 = vmatpush1.msra.mxu0 0.0
        %964 = vmatprep.subr.mxu0 0.0
        %965 = vmatpush1.msra.mxu0 0.0
        %966 = vmatprep.subr.mxu0 0.0
        %967 = vmatpush1.msra.mxu0 0.0
        %968 = vmatprep.subr.mxu0 0.0
        %969 = vmatpush1.msra.mxu0 0.0
        %970 = vmatprep.subr.mxu0 0.0
        %971 = vmatpush1.msra.mxu0 0.0
        %972 = vmatprep.subr.mxu0 0.0
        %973 = vmatpush1.msra.mxu0 0.0
        %974 = vmatprep.subr.mxu0 0.0
        %975 = vmatpush1.msra.mxu0 0.0
        %976 = vmatprep.subr.mxu0 0.0
        %977 = vmatpush1.msra.mxu0 0.0
        %978 = vmatprep.subr.mxu0 0.0
        %979 = vmatpush1.msra.mxu0 0.0
        %980 = vmatprep.subr.mxu0 0.0
        %981 = vmatpush1.msra.mxu0 0.0
        %982 = vmatprep.subr.mxu0 0.0
        %983 = vmatpush1.msra.mxu0 0.0
        %984 = vmatprep.subr.mxu0 0.0
        %985 = vmatpush1.msra.mxu0 0.0
        %986 = vmatprep.subr.mxu0 0.0
        %987 = vmatpush1.msra.mxu0 0.0
        %988 = vmatprep.subr.mxu0 0.0
        %989 = vmatpush1.msra.mxu0 0.0
        %990 = vmatprep.subr.mxu0 0.0
        %991 = vmatpush1.msra.mxu0 0.0
        %992 = vmatprep.mubr.f32.mxu0 0.0
        %993 = vmatmul.mubr.f32.gmra.mrb[0].mxu0 %v926
        %v994 = vpop.f32.mrb[0].mxu0
        %v995 = vadd.f32 0.0, %v994
        %v996 = vpop.f32.mrb[0].mxu0
        %v997 = vadd.f32 0.0, %v996
        %998 = vdwg.mxu0
        %v999 = vadd.f32 %v910, %v995
        %v1000 = vadd.f32 %v911, %v997
        %s1001 = scalar_lea.vmem %s2, 56
        %v1002 = vld [vmem:[%s1001] sm:$0xff]
        %1003 = vrot.lane.b32.xlu0 %v387, 95
        %v1004 = vpop.permute.xlu0 %1003
        %1005 = vrot.lane.b32.xlu0 %v388, 95
        %v1006 = vpop.permute.xlu0 %1005
        %1007 = vrot.lane.b32.xlu0 %v389, 95
        %v1008 = vpop.permute.xlu0 %1007
        %vm1009 = vcmask 777216
        %v1010 = vsel %vm1009, %v1004, %v1006
        %v1011 = vsel %vm1009, %v1006, %v1008
        %v1015 = vsel %vm407, %v1002, 0
        %1017 = vmatprep.subr.mxu0 %v1011
        %1018 = vmatpush1.msra.mxu0 %v1010
        %1019 = vmatprep.subr.mxu0 0.0
        %1020 = vmatpush1.msra.mxu0 0.0
        %1021 = vmatprep.subr.mxu0 0.0
        %1022 = vmatpush1.msra.mxu0 0.0
        %1023 = vmatprep.subr.mxu0 0.0
        %1024 = vmatpush1.msra.mxu0 0.0
        %1025 = vmatprep.subr.mxu0 0.0
        %1026 = vmatpush1.msra.mxu0 0.0
        %1027 = vmatprep.subr.mxu0 0.0
        %1028 = vmatpush1.msra.mxu0 0.0
        %1029 = vmatprep.subr.mxu0 0.0
        %1030 = vmatpush1.msra.mxu0 0.0
        %1031 = vmatprep.subr.mxu0 0.0
        %1032 = vmatpush1.msra.mxu0 0.0
        %1033 = vmatprep.subr.mxu0 0.0
        %1034 = vmatpush1.msra.mxu0 0.0
        %1035 = vmatprep.subr.mxu0 0.0
        %1036 = vmatpush1.msra.mxu0 0.0
        %1037 = vmatprep.subr.mxu0 0.0
        %1038 = vmatpush1.msra.mxu0 0.0
        %1039 = vmatprep.subr.mxu0 0.0
        %1040 = vmatpush1.msra.mxu0 0.0
        %1041 = vmatprep.subr.mxu0 0.0
        %1042 = vmatpush1.msra.mxu0 0.0
        %1043 = vmatprep.subr.mxu0 0.0
        %1044 = vmatpush1.msra.mxu0 0.0
        %1045 = vmatprep.subr.mxu0 0.0
        %1046 = vmatpush1.msra.mxu0 0.0
        %1047 = vmatprep.subr.mxu0 0.0
        %1048 = vmatpush1.msra.mxu0 0.0
        %1049 = vmatprep.subr.mxu0 0.0
        %1050 = vmatpush1.msra.mxu0 0.0
        %1051 = vmatprep.subr.mxu0 0.0
        %1052 = vmatpush1.msra.mxu0 0.0
        %1053 = vmatprep.subr.mxu0 0.0
        %1054 = vmatpush1.msra.mxu0 0.0
        %1055 = vmatprep.subr.mxu0 0.0
        %1056 = vmatpush1.msra.mxu0 0.0
        %1057 = vmatprep.subr.mxu0 0.0
        %1058 = vmatpush1.msra.mxu0 0.0
        %1059 = vmatprep.subr.mxu0 0.0
        %1060 = vmatpush1.msra.mxu0 0.0
        %1061 = vmatprep.subr.mxu0 0.0
        %1062 = vmatpush1.msra.mxu0 0.0
        %1063 = vmatprep.subr.mxu0 0.0
        %1064 = vmatpush1.msra.mxu0 0.0
        %1065 = vmatprep.subr.mxu0 0.0
        %1066 = vmatpush1.msra.mxu0 0.0
        %1067 = vmatprep.subr.mxu0 0.0
        %1068 = vmatpush1.msra.mxu0 0.0
        %1069 = vmatprep.subr.mxu0 0.0
        %1070 = vmatpush1.msra.mxu0 0.0
        %1071 = vmatprep.subr.mxu0 0.0
        %1072 = vmatpush1.msra.mxu0 0.0
        %1073 = vmatprep.subr.mxu0 0.0
        %1074 = vmatpush1.msra.mxu0 0.0
        %1075 = vmatprep.subr.mxu0 0.0
        %1076 = vmatpush1.msra.mxu0 0.0
        %1077 = vmatprep.subr.mxu0 0.0
        %1078 = vmatpush1.msra.mxu0 0.0
        %1079 = vmatprep.subr.mxu0 0.0
        %1080 = vmatpush1.msra.mxu0 0.0
        %1081 = vmatprep.mubr.f32.mxu0 0.0
        %1082 = vmatmul.mubr.f32.gmra.mrb[0].mxu0 %v1015
        %v1083 = vpop.f32.mrb[0].mxu0
        %v1084 = vadd.f32 0.0, %v1083
        %v1085 = vpop.f32.mrb[0].mxu0
        %v1086 = vadd.f32 0.0, %v1085
        %1087 = vdwg.mxu0
        %v1088 = vadd.f32 %v999, %v1084
        %v1089 = vadd.f32 %v1000, %v1086
        %s1090 = scalar_lea.vmem %s2, 64
        %v1091 = vld [vmem:[%s1090] sm:$0xff]
        %1092 = vrot.lane.b32.xlu0 %v387, 94
        %v1093 = vpop.permute.xlu0 %1092
        %1094 = vrot.lane.b32.xlu0 %v388, 94
        %v1095 = vpop.permute.xlu0 %1094
        %1096 = vrot.lane.b32.xlu0 %v389, 94
        %v1097 = vpop.permute.xlu0 %1096
        %vm1098 = vcmask 769024
        %v1099 = vsel %vm1098, %v1093, %v1095
        %v1100 = vsel %vm1098, %v1095, %v1097
        %v1104 = vsel %vm407, %v1091, 0
        %1106 = vmatprep.subr.mxu0 %v1100
        %1107 = vmatpush1.msra.mxu0 %v1099
        %1108 = vmatprep.subr.mxu0 0.0
        %1109 = vmatpush1.msra.mxu0 0.0
        %1110 = vmatprep.subr.mxu0 0.0
        %1111 = vmatpush1.msra.mxu0 0.0
        %1112 = vmatprep.subr.mxu0 0.0
        %1113 = vmatpush1.msra.mxu0 0.0
        %1114 = vmatprep.subr.mxu0 0.0
        %1115 = vmatpush1.msra.mxu0 0.0
        %1116 = vmatprep.subr.mxu0 0.0
        %1117 = vmatpush1.msra.mxu0 0.0
        %1118 = vmatprep.subr.mxu0 0.0
        %1119 = vmatpush1.msra.mxu0 0.0
        %1120 = vmatprep.subr.mxu0 0.0
        %1121 = vmatpush1.msra.mxu0 0.0
        %1122 = vmatprep.subr.mxu0 0.0
        %1123 = vmatpush1.msra.mxu0 0.0
        %1124 = vmatprep.subr.mxu0 0.0
        %1125 = vmatpush1.msra.mxu0 0.0
        %1126 = vmatprep.subr.mxu0 0.0
        %1127 = vmatpush1.msra.mxu0 0.0
        %1128 = vmatprep.subr.mxu0 0.0
        %1129 = vmatpush1.msra.mxu0 0.0
        %1130 = vmatprep.subr.mxu0 0.0
        %1131 = vmatpush1.msra.mxu0 0.0
        %1132 = vmatprep.subr.mxu0 0.0
        %1133 = vmatpush1.msra.mxu0 0.0
        %1134 = vmatprep.subr.mxu0 0.0
        %1135 = vmatpush1.msra.mxu0 0.0
        %1136 = vmatprep.subr.mxu0 0.0
        %1137 = vmatpush1.msra.mxu0 0.0
        %1138 = vmatprep.subr.mxu0 0.0
        %1139 = vmatpush1.msra.mxu0 0.0
        %1140 = vmatprep.subr.mxu0 0.0
        %1141 = vmatpush1.msra.mxu0 0.0
        %1142 = vmatprep.subr.mxu0 0.0
        %1143 = vmatpush1.msra.mxu0 0.0
        %1144 = vmatprep.subr.mxu0 0.0
        %1145 = vmatpush1.msra.mxu0 0.0
        %1146 = vmatprep.subr.mxu0 0.0
        %1147 = vmatpush1.msra.mxu0 0.0
        %1148 = vmatprep.subr.mxu0 0.0
        %1149 = vmatpush1.msra.mxu0 0.0
        %1150 = vmatprep.subr.mxu0 0.0
        %1151 = vmatpush1.msra.mxu0 0.0
        %1152 = vmatprep.subr.mxu0 0.0
        %1153 = vmatpush1.msra.mxu0 0.0
        %1154 = vmatprep.subr.mxu0 0.0
        %1155 = vmatpush1.msra.mxu0 0.0
        %1156 = vmatprep.subr.mxu0 0.0
        %1157 = vmatpush1.msra.mxu0 0.0
        %1158 = vmatprep.subr.mxu0 0.0
        %1159 = vmatpush1.msra.mxu0 0.0
        %1160 = vmatprep.subr.mxu0 0.0
        %1161 = vmatpush1.msra.mxu0 0.0
        %1162 = vmatprep.subr.mxu0 0.0
        %1163 = vmatpush1.msra.mxu0 0.0
        %1164 = vmatprep.subr.mxu0 0.0
        %1165 = vmatpush1.msra.mxu0 0.0
        %1166 = vmatprep.subr.mxu0 0.0
        %1167 = vmatpush1.msra.mxu0 0.0
        %1168 = vmatprep.subr.mxu0 0.0
        %1169 = vmatpush1.msra.mxu0 0.0
        %1170 = vmatprep.mubr.f32.mxu0 0.0
        %1171 = vmatmul.mubr.f32.gmra.mrb[0].mxu0 %v1104
        %v1172 = vpop.f32.mrb[0].mxu0
        %v1173 = vadd.f32 0.0, %v1172
        %v1174 = vpop.f32.mrb[0].mxu0
        %v1175 = vadd.f32 0.0, %v1174
        %1176 = vdwg.mxu0
        %v1177 = vadd.f32 %v1088, %v1173
        %v1178 = vadd.f32 %v1089, %v1175
        %1179 = vst [vmem:[%s336] sm:$0xff] %v1177
        %1180 = vst [vmem:[%s336 + $0x8] sm:$0xff] %v1178
        %v1181 = vld [vmem:[%s384] sm:$0x3]
        %v1183 = vlaneseq
        %v1184 = vshrl.u32 %v1183, 7
        %v1185 = vsub.s32 0, %v1184
        %v1186 = vrot.slane %v1181, %v1185
        %v1187 = vlaneseq
        %v1188 = vshrl.u32 %v1187, 7
        %v1189 = vsub.s32 1, %v1188
        %v1190 = vrot.slane %v1181, %v1189
        %v1193 = vmul.f32 %v1177, %v1186
        %v1194 = vmul.f32 %v1178, %v1190
        %v1195 = vadd.f32 %v1193, 0.0
        %v1196 = vmul.f32 %v1193, %v1193
        %v1197 = vadd.f32 %v1196, 0.0
        %v1198 = vadd.f32 %v1195, %v1194
        %v1199 = vmul.f32 %v1194, %v1194
        %v1200 = vadd.f32 %v1197, %v1199
        %1201 = vst [vmem:[%s343] sm:$0xff] %v1198
        %1202 = vst [vmem:[%s350] sm:$0xff] %v1200
        %s1203 = sand.u32 %s153, 1
        %s1204 = scalar_lea.sflag [#allocation3], %s1203
        %s1205 = sand.u32 %s153, 1
        %s1206 = smul.addr %s1205, 16
        %s1207 = scalar_lea.vmem [#allocation2], %s1206
        %s1208 = sand.u32 %s24, 1
        %s1209 = scalar_lea.sflag [#allocation5], %s1208
        %s1210 = sand.u32 %s181, 1
        %s1211 = smul.addr %s1210, 8
        %s1212 = scalar_lea.vmem [#allocation4], %s1211
        %s1213 = sand.u32 %s24, 1
        %s1214 = scalar_lea.sflag [#allocation5], %s1213
        %s1215 = sand.u32 %s209, 1
        %s1216 = smul.addr %s1215, 8
        %s1217 = scalar_lea.vmem [#allocation6], %s1216
        // Predicated region
        $region37: #{tpu_custom_call.1} parent=35 // pred_check
          %p1218 = pneg %p163
        $region38: #{tpu_custom_call.1} parent=35 // pred_check_branch
          %1220 = sbr.rel (%p1218) target = $region40
        $region39: #{tpu_custom_call.1} parent=35 // pred_region
          %s1221 = smul.u32 2, %s29
          %s1223 = ssub.s32 256, 256
          %1224 = vsyncadd %s1204, %s1223
          %s1225 = smul.addr %s28, 2
          %s1226 = sadd.s32 %s1221, %s1225
          %s1227 = smul.addr %s1226, 128
          %s1228 = scalar_lea.hbm %s4, %s1227
          %s1230 = sshll.u32 %s1207, 4
          %s1231 = int_to_ptr.vmem [resolvable:$true] %s1230
          %1233 = dma.vmem_to_hbm [thread:$0]  %s1231, 256, %s1228, %s1204
        $region40: #{tpu_custom_call.1} parent=35 // pred_fallthru
          _
        // Predicated region
        $region41: #{tpu_custom_call.1} parent=35 // pred_check
          %p1234 = pneg %p191
        $region42: #{tpu_custom_call.1} parent=35 // pred_check_branch
          %1236 = sbr.rel (%p1234) target = $region44
        $region43: #{tpu_custom_call.1} parent=35 // pred_region
          %s1238 = ssub.s32 128, 128
          %1239 = vsyncadd %s1209, %s1238
          %s1240 = sadd.s32 %s29, %s28
          %s1241 = smul.addr %s1240, 128
          %s1242 = scalar_lea.hbm %s5, %s1241
          %s1244 = sshll.u32 %s1212, 4
          %s1245 = int_to_ptr.vmem [resolvable:$true] %s1244
          %1247 = dma.vmem_to_hbm [thread:$0]  %s1245, 128, %s1242, %s1209
        $region44: #{tpu_custom_call.1} parent=35 // pred_fallthru
          _
        // Predicated region
        $region45: #{tpu_custom_call.1} parent=35 // pred_check
          %p1248 = pneg %p219
        $region46: #{tpu_custom_call.1} parent=35 // pred_check_branch
          %1250 = sbr.rel (%p1248) target = $region48
        $region47: #{tpu_custom_call.1} parent=35 // pred_region
          %s1252 = ssub.s32 128, 128
          %1253 = vsyncadd %s1214, %s1252
          %s1254 = sadd.s32 %s29, %s28
          %s1255 = smul.addr %s1254, 128
          %s1256 = scalar_lea.hbm %s6, %s1255
          %s1258 = sshll.u32 %s1217, 4
          %s1259 = int_to_ptr.vmem [resolvable:$true] %s1258
          %1261 = dma.vmem_to_hbm [thread:$0]  %s1259, 128, %s1256, %s1214
        $region48: #{tpu_custom_call.1} parent=35 // pred_fallthru
          _
      $region36: #{tpu_custom_call.1} parent=5 // pred_fallthru
        _
      %p1262 = scmp.le.s32.totalorder 2, %s19
      // Predicated region
      $region49: #{tpu_custom_call.1} parent=5 // pred_check
        %p1263 = pneg %p1262
      $region50: #{tpu_custom_call.1} parent=5 // pred_check_branch
        %1265 = sbr.rel (%p1263) target = $region52
      $region51: #{tpu_custom_call.1} parent=5 // pred_region
        %s1266 = ssub.s32 %s19, 2
        // Predicated region
        $region53: #{tpu_custom_call.1} parent=51 // pred_check
          %p1267 = pneg %p169
        $region54: #{tpu_custom_call.1} parent=51 // pred_check_branch
          %1269 = sbr.rel (%p1267) target = $region56
        $region55: #{tpu_custom_call.1} parent=51 // pred_region
          %s1270 = sand.u32 %s154, 1
          %s1271 = scalar_lea.sflag [#allocation3], %s1270
          %s1272 = sand.u32 %s154, 1
          %s1273 = smul.addr %s1272, 16
          %s1274 = scalar_lea.vmem [#allocation2], %s1273
          %1275 = dma.done %s1271, 256
        $region56: #{tpu_custom_call.1} parent=51 // pred_fallthru
          _
        // Predicated region
        $region57: #{tpu_custom_call.1} parent=51 // pred_check
          %p1276 = pneg %p197
        $region58: #{tpu_custom_call.1} parent=51 // pred_check_branch
          %1278 = sbr.rel (%p1276) target = $region60
        $region59: #{tpu_custom_call.1} parent=51 // pred_region
          %s1279 = sand.u32 %s25, 1
          %s1280 = scalar_lea.sflag [#allocation5], %s1279
          %s1281 = sand.u32 %s182, 1
          %s1282 = smul.addr %s1281, 8
          %s1283 = scalar_lea.vmem [#allocation4], %s1282
          %1284 = dma.done %s1280, 128
        $region60: #{tpu_custom_call.1} parent=51 // pred_fallthru
          _
        // Predicated region
        $region61: #{tpu_custom_call.1} parent=51 // pred_check
          %p1285 = pneg %p225
        $region62: #{tpu_custom_call.1} parent=51 // pred_check_branch
          %1287 = sbr.rel (%p1285) target = $region64
        $region63: #{tpu_custom_call.1} parent=51 // pred_region
          %s1288 = sand.u32 %s25, 1
          %s1289 = scalar_lea.sflag [#allocation5], %s1288
          %s1290 = sand.u32 %s210, 1
          %s1291 = smul.addr %s1290, 8
          %s1292 = scalar_lea.vmem [#allocation6], %s1291
          %1293 = dma.done %s1289, 128
        $region64: #{tpu_custom_call.1} parent=51 // pred_fallthru
          _
      $region52: #{tpu_custom_call.1} parent=5 // pred_fallthru
        _
    $region6: #{tpu_custom_call.1} parent=1 // loop_footer
      %s23 = sadd.s32 1, %s19
    $region7: #{tpu_custom_call.1} parent=1 // loop_footer_branch
      %18 = sbr.rel target = $region3
    $region8: #{tpu_custom_call.1} parent=1 // loop_exit
      _
    %1294 = vsyncpa [#allocation3], 1
    %s1295 = scalar_lea.sflag [#allocation3], 1
    %1296 = vsyncpa %s1295, 1
    %1297 = vsyncpa [#allocation5], 1
    %s1298 = scalar_lea.sflag [#allocation5], 1
    %1299 = vsyncpa %s1298, 1

</llo_original>
